<compile_context>
chip_gen: v5e
topology: v5e:2x2
jax: 0.10.0
libtpu: 0.0.40
codegen_flags: <defaults>
</compile_context>

<pallas_src>
import functools
import math

import jax
import jax.numpy as jnp
from jax.experimental import pallas as pl
from jax.experimental.pallas import tpu as pltpu

LANES = 128


# ---------------------------------------------------------------------------
# Small helpers
# ---------------------------------------------------------------------------
def _round_up(a, b):
    return (a + b - 1) // b * b


@functools.lru_cache(maxsize=1)
def _vmem_target_bytes():
    """Per-core VMEM we allow ourselves, with headroom for Mosaic internals."""
    try:
        cap = int(pltpu.get_tpu_info().vmem_capacity_bytes)
    except Exception:  # pragma: no cover - conservative fallback
        cap = 64 << 20  # assume v7x-sized 64 MiB / TensorCore
    # ~25% headroom: v5e/v6e (128 MiB) -> 96 MiB, v7x (64 MiB/TC) -> 48 MiB.
    return int(min(cap * 3 // 4, 96 << 20))


def _i8_to_bf16(ref):
    """Widen an int8 tile to bf16 MXU input (values 0..127 are exact in bf16)."""
    return ref[...].astype(jnp.float32).astype(jnp.bfloat16)


def _mlp_head(hf, hu, bfu, wfc, bfc):
    """concat -> bias -> relu -> fc -> relu (dropout is identity in eval mode)."""
    hcat = jnp.maximum(jnp.concatenate([hf, hu], axis=-1) + bfu, 0.0)
    h = jnp.dot(hcat, wfc, preferred_element_type=jnp.float32) + bfc
    return jnp.maximum(h, 0.0)


# ---------------------------------------------------------------------------
# Pallas kernels
# ---------------------------------------------------------------------------
def faultgnn_fused_kernel(afq_ref, afs_ref, arq_ref, ars_ref, xwf_ref, xwu_ref,
                          bfu_ref, wfc_ref, bfc_ref, wo_ref, bo_ref, out_ref):
    """Whole forward in one call (small graphs: everything resident in VMEM)."""
    af = _i8_to_bf16(afq_ref)
    ar = _i8_to_bf16(arq_ref)
    hf = jnp.dot(af, xwf_ref[...], preferred_element_type=jnp.float32) * afs_ref[...]
    hu = jnp.dot(ar, xwu_ref[...], preferred_element_type=jnp.float32) * ars_ref[...]
    h = _mlp_head(hf, hu, bfu_ref[...], wfc_ref[...], bfc_ref[...])
    agg = jnp.dot(af, h.astype(jnp.bfloat16),
                  preferred_element_type=jnp.float32) * afs_ref[...]
    o = jnp.dot(agg, wo_ref[...], preferred_element_type=jnp.float32) + bo_ref[...]
    out_ref[...] = jax.nn.sigmoid(o)


def faultgnn_stage1_kernel(afq_ref, arq_ref, afs_ref, ars_ref, xwf_ref, xwu_ref,
                           bfu_ref, wfc_ref, bfc_ref, h_ref, accf_ref, accu_ref):
    """2-D grid (row tile, k tile): both GCN aggregations + fused fc epilogue.

    afq/arq : (rt, kt) int8 adjacency tiles (streamed)
    xwf/xwu : (kt, H)  bf16 hoisted input projections (streamed along k)
    h_ref   : (rt, H)  bf16 hidden output, written only at the last k step
    """
    k = pl.program_id(1)

    @pl.when(k == 0)
    def _():
        accf_ref[...] = jnp.zeros_like(accf_ref)
        accu_ref[...] = jnp.zeros_like(accu_ref)

    accf_ref[...] += jnp.dot(_i8_to_bf16(afq_ref), xwf_ref[...],
                             preferred_element_type=jnp.float32)
    accu_ref[...] += jnp.dot(_i8_to_bf16(arq_ref), xwu_ref[...],
                             preferred_element_type=jnp.float32)

    @pl.when(k == pl.num_programs(1) - 1)
    def _():
        hf = accf_ref[...] * afs_ref[...]          # per-row dequant after reduction
        hu = accu_ref[...] * ars_ref[...]
        h = _mlp_head(hf, hu, bfu_ref[...], wfc_ref[...], bfc_ref[...])
        h_ref[...] = h.astype(h_ref.dtype)


def faultgnn_stage2_kernel(afq_ref, afs_ref, h_ref, wo_ref, bo_ref, out_ref, acc_ref):
    """2-D grid: out = sigmoid((Ahat @ h) @ Wo + bo), Wo applied in the epilogue."""
    k = pl.program_id(1)

    @pl.when(k == 0)
    def _():
        acc_ref[...] = jnp.zeros_like(acc_ref)

    acc_ref[...] += jnp.dot(_i8_to_bf16(afq_ref), h_ref[...],
                            preferred_element_type=jnp.float32)

    @pl.when(k == pl.num_programs(1) - 1)
    def _():
        agg = acc_ref[...] * afs_ref[...]
        o = jnp.dot(agg, wo_ref[...], preferred_element_type=jnp.float32) + bo_ref[...]
        out_ref[...] = jax.nn.sigmoid(o)


# ---------------------------------------------------------------------------
# Wrapper
# ---------------------------------------------------------------------------
def _gcn_adjacency_int8(src, dst, n, n_pad):
    """Ahat = D^-1/2 (A+I) D^-1/2 built directly at padded size, int8 + per-row scale.

    Entries live at Ahat[dst, src]; padded rows/cols are exactly zero and padded
    rows get scale=1 (-> quantized 0).  One fused XLA pass, no separate pad/astype.
    """
    loops = jnp.arange(n, dtype=src.dtype)
    s = jnp.concatenate([src, loops])
    d = jnp.concatenate([dst, loops])
    a = jnp.zeros((n_pad, n_pad), jnp.float32).at[d, s].add(1.0)
    deg = jnp.sum(a, axis=1)
    dinv = jnp.where(deg > 0, jax.lax.rsqrt(deg), 0.0)
    ahat = (dinv[:, None] * a) * dinv[None, :]
    rowmax = jnp.max(ahat, axis=1, keepdims=True)
    scale = jnp.where(rowmax > 0, rowmax / 127.0, 1.0)
    q = jnp.round(ahat / scale).astype(jnp.int8)
    return q, scale.astype(jnp.float32)


def _fused_vmem_estimate(n_pad):
    # 2 int8 adjacencies (2 buffers) + in-kernel f32/bf16 widened copies + activations
    return (4 * n_pad * n_pad + 12 * n_pad * n_pad
            + 8 * n_pad * LANES * 4 + (2 << 20))


def _tiled_vmem_estimate(rt, kt):
    # adjacency tiles (2 arrays x 2 bufs, int8) + xw/h tiles (lane-padded bf16, 2 bufs)
    # + scales / accumulators / outputs (lane-padded) + weights
    return 4 * rt * kt + 1024 * kt + 3584 * rt + (1 << 20)


def _pick_tiles(n_pad, budget_bytes):
    """Largest (row_tile, k_tile) fitting the budget; prefer long contiguous k DMAs,
    cap row_tile so the parallel row axis has >= 8 steps (megacore steady state)."""
    base = n_pad // LANES
    cands = sorted({d * LANES for d in range(1, base + 1) if base % d == 0},
                   reverse=True)
    row_cap = max(n_pad // 8, LANES)
    for kt in cands:
        for rt in cands:
            if rt > row_cap:
                continue
            if _tiled_vmem_estimate(rt, kt) <= budget_bytes:
                return rt, kt
    return LANES, LANES


def faultgnn_forward(x, edge_index, params, *, row_tile=None, k_tile=None,
                     force_tiled=False):
    """x: [N, Din] f32, edge_index: [2, E] int32, params: dict of weights."""
    n = x.shape[0]
    h_dim = params["wf"].shape[1]
    n_pad = _round_up(max(n, 256), 256)          # lane / MXU / int8-tile aligned
    vmem_target = _vmem_target_bytes()

    # ---- plain-JAX prep (one fused pass each): quantized adjacencies + projection ----
    afq, afs = _gcn_adjacency_int8(edge_index[0], edge_index[1], n, n_pad)   # forward
    arq, ars = _gcn_adjacency_int8(edge_index[1], edge_index[0], n, n_pad)   # reversed
    xw = jnp.dot(x, jnp.concatenate([params["wf"], params["wu"]], axis=1))   # [n, 2H]
    xw_p = jnp.zeros((n_pad, 2 * h_dim), jnp.float32).at[:n].set(xw)
    xw_p = xw_p.astype(jnp.bfloat16)
    xwf_p, xwu_p = xw_p[:, :h_dim], xw_p[:, h_dim:]

    bfu = jnp.concatenate([params["bf"], params["bu"]], axis=1)              # [1, 2H]
    wfc, bfc = params["wfc"], params["bfc"]                                  # [2H,H],[1,H]
    wo_p = jnp.pad(params["wo"], ((0, 0), (0, LANES - 1)))                   # [H, 128]
    bo_p = jnp.tile(params["bo"], (1, LANES))                                # [1, 128]

    use_fused = (not force_tiled
                 and _fused_vmem_estimate(n_pad) <= int(0.75 * vmem_target))

    # ----------------------- small-N fused single-call path ------------------------
    if use_fused:
        full = lambda shape: pl.BlockSpec(shape, lambda i: (0, 0))
        out_p = pl.pallas_call(
            faultgnn_fused_kernel,
            out_shape=jax.ShapeDtypeStruct((n_pad, LANES), jnp.float32),
            grid=(1,),
            in_specs=[
                full((n_pad, n_pad)), full((n_pad, 1)),
                full((n_pad, n_pad)), full((n_pad, 1)),
                full((n_pad, h_dim)), full((n_pad, h_dim)),
                full((1, 2 * h_dim)), full((2 * h_dim, h_dim)), full((1, h_dim)),
                full((h_dim, LANES)), full((1, LANES)),
            ],
            out_specs=full((n_pad, LANES)),
            compiler_params=pltpu.CompilerParams(
                dimension_semantics=("arbitrary",),
                vmem_limit_bytes=vmem_target),
            cost_estimate=pl.CostEstimate(
                flops=int(6 * n_pad * n_pad * h_dim + 6 * n_pad * h_dim * h_dim),
                transcendentals=int(n_pad * LANES),
                bytes_accessed=int(2 * n_pad * n_pad + 4 * n_pad * h_dim
                                   + n_pad * LANES * 4)),
        )(afq, afs, arq, ars, xwf_p, xwu_p, bfu, wfc, bfc, wo_p, bo_p)
        return out_p[:n, :1]

    # ----------------------- general 2-D (row, k) streamed path --------------------
    rt, kt = _pick_tiles(n_pad, int(0.7 * vmem_target))
    if row_tile is not None:
        cand = max(32, (min(row_tile, n_pad) // 32) * 32)
        if n_pad % cand == 0:
            rt = cand
    if k_tile is not None:
        cand = max(LANES, (min(k_tile, n_pad) // LANES) * LANES)
        if n_pad % cand == 0:
            kt = cand
    grid = (n_pad // rt, n_pad // kt)

    adj_spec = pl.BlockSpec((rt, kt), lambda i, k: (i, k))
    scale_spec = pl.BlockSpec((rt, 1), lambda i, k: (i, 0))
    kvec_spec = pl.BlockSpec((kt, h_dim), lambda i, k: (k, 0))
    const = lambda shape: pl.BlockSpec(shape, lambda i, k: (0, 0))
    # TODO(synk): pipeline_mode=pl.Buffered(1) on the tiny constant weight blocks once
    # single-buffering is needed; with the O(N) residents streamed it is negligible.

    n_row_tiles = n_pad // rt

    # ------------------------- stage 1: hidden h -----------------------------------
    h_hid = pl.pallas_call(
        faultgnn_stage1_kernel,
        out_shape=jax.ShapeDtypeStruct((n_pad, h_dim), jnp.bfloat16),
        grid=grid,
        in_specs=[adj_spec, adj_spec, scale_spec, scale_spec,
                  kvec_spec, kvec_spec,
                  const((1, 2 * h_dim)), const((2 * h_dim, h_dim)), const((1, h_dim))],
        out_specs=pl.BlockSpec((rt, h_dim), lambda i, k: (i, 0)),
        scratch_shapes=[pltpu.VMEM((rt, h_dim), jnp.float32),
                        pltpu.VMEM((rt, h_dim), jnp.float32)],
        compiler_params=pltpu.CompilerParams(
            dimension_semantics=("parallel", "arbitrary"),
            vmem_limit_bytes=vmem_target),
        cost_estimate=pl.CostEstimate(
            flops=int(4 * n_pad * n_pad * h_dim + 6 * n_pad * h_dim * h_dim),
            transcendentals=0,
            bytes_accessed=int(2 * n_pad * n_pad
                               + n_row_tiles * n_pad * 2 * h_dim * 2
                               + n_pad * h_dim * 2)),
    )(afq, arq, afs, ars, xwf_p, xwu_p, bfu, wfc, bfc)

    # ------------------------- stage 2: final GCN + sigmoid ------------------------
    out_p = pl.pallas_call(
        faultgnn_stage2_kernel,
        out_shape=jax.ShapeDtypeStruct((n_pad, LANES), jnp.float32),
        grid=grid,
        in_specs=[adj_spec, scale_spec, kvec_spec,
                  const((h_dim, LANES)), const((1, LANES))],
        out_specs=pl.BlockSpec((rt, LANES), lambda i, k: (i, 0)),
        scratch_shapes=[pltpu.VMEM((rt, h_dim), jnp.float32)],
        compiler_params=pltpu.CompilerParams(
            dimension_semantics=("parallel", "arbitrary"),
            vmem_limit_bytes=vmem_target),
        cost_estimate=pl.CostEstimate(
            flops=int(2 * n_pad * n_pad * h_dim + 2 * n_pad * h_dim * LANES),
            transcendentals=int(n_pad * LANES),
            bytes_accessed=int(n_pad * n_pad
                               + n_row_tiles * n_pad * h_dim * 2
                               + n_pad * LANES * 4)),
    )(afq, afs, h_hid, wo_p, bo_p)

    return out_p[:n, :1]


# ---------------------------------------------------------------------------
# Deterministic parameter init (Xavier-uniform weights, zero biases)
# ---------------------------------------------------------------------------
def xavier_uniform(key, fan_in, fan_out):
    bound = math.sqrt(6.0 / (fan_in + fan_out))
    # stored already transposed: [in, out], kernels compute x @ W
    return jax.random.uniform(key, (fan_in, fan_out), jnp.float32,
                              minval=-bound, maxval=bound)


def init_params(key, in_dim, hidden_dim):
    k = jax.random.split(key, 4)
    return {
        "wf": xavier_uniform(k[0], in_dim, hidden_dim),            # conv_forward.lin.W^T
        "bf": jnp.zeros((1, hidden_dim), jnp.float32),
        "wu": xavier_uniform(k[1], in_dim, hidden_dim),            # conv_upstream.lin.W^T
        "bu": jnp.zeros((1, hidden_dim), jnp.float32),
        "wfc": xavier_uniform(k[2], 2 * hidden_dim, hidden_dim),   # fc.weight^T
        "bfc": jnp.zeros((1, hidden_dim), jnp.float32),
        "wo": xavier_uniform(k[3], hidden_dim, 1),                 # conv_out.lin.W^T
        "bo": jnp.zeros((1, 1), jnp.float32),
    }


# ---------------------------------------------------------------------------
# Pure-JAX reference (dense f32, no quantization) for correctness check
# ---------------------------------------------------------------------------
def _gcn_norm_adj_f32(src, dst, n):
    loops = jnp.arange(n, dtype=src.dtype)
    s = jnp.concatenate([src, loops])
    d = jnp.concatenate([dst, loops])
    a = jnp.zeros((n, n), jnp.float32).at[d, s].add(1.0)
    deg = a.sum(axis=1)
    dinv = jnp.where(deg > 0, 1.0 / jnp.sqrt(deg), 0.0)
    return dinv[:, None] * a * dinv[None, :]


def reference_forward(x, edge_index, params):
    n = x.shape[0]
    af = _gcn_norm_adj_f32(edge_index[0], edge_index[1], n)
    ar = _gcn_norm_adj_f32(edge_index[1], edge_index[0], n)
    hf = jax.nn.relu(af @ (x @ params["wf"]) + params["bf"])
    hu = jax.nn.relu(ar @ (x @ params["wu"]) + params["bu"])
    h = jax.nn.relu(jnp.concatenate([hf, hu], axis=1) @ params["wfc"] + params["bfc"])
    o = af @ (h @ params["wo"]) + params["bo"]
    return jax.nn.sigmoid(o)


if __name__ == "__main__":
    N, IN_DIM, HIDDEN = 256, 4, 32

    key = jax.random.PRNGKey(0)
    kx, kp = jax.random.split(key)

    # data.x : node features [N, in_dim]
    x = jax.random.normal(kx, (N, IN_DIM), jnp.float32)

    # data.edge_index : directed ring + skip connections, [2, E]
    ids = jnp.arange(N)
    src = jnp.concatenate([ids, ids])
    dst = jnp.concatenate([(ids + 1) % N, (ids + 5) % N])
    edge_index = jnp.stack([src, dst], axis=0).astype(jnp.int32)

    params = init_params(kp, IN_DIM, HIDDEN)
    ref = reference_forward(x, edge_index, params)

    fwd = jax.jit(faultgnn_forward,
                  static_argnames=("row_tile", "k_tile", "force_tiled"))

    # Default dispatch at this size: fused single-kernel path.
    out_fused = jax.block_until_ready(fwd(x, edge_index, params))
    # Force the streamed 2-D (row, k) path (grid=(4,2)) so the accumulator /
    # epilogue pipeline is exercised too.
    out_tiled = jax.block_until_ready(
        fwd(x, edge_index, params, force_tiled=True, row_tile=64, k_tile=128))

    assert out_fused.shape == (N, 1) and out_tiled.shape == (N, 1)
    err_f = float(jnp.max(jnp.abs(out_fused - ref)))
    err_t = float(jnp.max(jnp.abs(out_tiled - ref)))
    # int8 per-row-scaled adjacency + bf16 projections -> loosened tolerance.
    assert err_f < 2e-2, f"fused path mismatch vs reference: max abs err {err_f}"
    assert err_t < 2e-2, f"tiled path mismatch vs reference: max abs err {err_t}"

    print("KERNEL_OK")
</pallas_src>

<mosaic_0001>
module attributes {stable_mosaic.version = 11 : i64} {
  func.func @faultgnn_fused_kernel(%arg0: i32, %arg1: memref<256x256xi8, #tpu.memory_space<vmem>>, %arg2: memref<256x1xf32, #tpu.memory_space<vmem>>, %arg3: memref<256x256xi8, #tpu.memory_space<vmem>>, %arg4: memref<256x1xf32, #tpu.memory_space<vmem>>, %arg5: memref<256x32xbf16, #tpu.memory_space<vmem>>, %arg6: memref<256x32xbf16, #tpu.memory_space<vmem>>, %arg7: memref<1x64xf32, #tpu.memory_space<vmem>>, %arg8: memref<64x32xf32, #tpu.memory_space<vmem>>, %arg9: memref<1x32xf32, #tpu.memory_space<vmem>>, %arg10: memref<32x128xf32, #tpu.memory_space<vmem>>, %arg11: memref<1x128xf32, #tpu.memory_space<vmem>>, %arg12: memref<256x128xf32, #tpu.memory_space<vmem>>) attributes {dimension_semantics = [#tpu.dimension_semantics<arbitrary>], iteration_bounds = array<i64: 1>, scalar_prefetch = 0 : i64, scratch_operands = 0 : i64, tpu.core_type = #tpu.core_type<tc>, window_params = [{pipeline_mode = #tpu.pipeline_mode<synchronous>, transform_indices = @transform_0, window_bounds = array<i64: 256, 256>}, {pipeline_mode = #tpu.pipeline_mode<synchronous>, transform_indices = @transform_1, window_bounds = array<i64: 256, 1>}, {pipeline_mode = #tpu.pipeline_mode<synchronous>, transform_indices = @transform_2, window_bounds = array<i64: 256, 256>}, {pipeline_mode = #tpu.pipeline_mode<synchronous>, transform_indices = @transform_3, window_bounds = array<i64: 256, 1>}, {pipeline_mode = #tpu.pipeline_mode<synchronous>, transform_indices = @transform_4, window_bounds = array<i64: 256, 32>}, {pipeline_mode = #tpu.pipeline_mode<synchronous>, transform_indices = @transform_5, window_bounds = array<i64: 256, 32>}, {pipeline_mode = #tpu.pipeline_mode<synchronous>, transform_indices = @transform_6, window_bounds = array<i64: 1, 64>}, {pipeline_mode = #tpu.pipeline_mode<synchronous>, transform_indices = @transform_7, window_bounds = array<i64: 64, 32>}, {pipeline_mode = #tpu.pipeline_mode<synchronous>, transform_indices = @transform_8, window_bounds = array<i64: 1, 32>}, {pipeline_mode = #tpu.pipeline_mode<synchronous>, transform_indices = @transform_9, window_bounds = array<i64: 32, 128>}, {pipeline_mode = #tpu.pipeline_mode<synchronous>, transform_indices = @transform_10, window_bounds = array<i64: 1, 128>}, {pipeline_mode = #tpu.pipeline_mode<synchronous>, transform_indices = @transform_11, window_bounds = array<i64: 256, 128>}]} {
    %c0 = arith.constant 0 : index
    %c0_0 = arith.constant 0 : index
    %0 = vector.load %arg1[%c0, %c0_0] : memref<256x256xi8, #tpu.memory_space<vmem>>, vector<256x256xi8>
    %1 = arith.sitofp %0 : vector<256x256xi8> to vector<256x256xf32>
    %2 = arith.truncf %1 : vector<256x256xf32> to vector<256x256xbf16>
    %c0_1 = arith.constant 0 : index
    %c0_2 = arith.constant 0 : index
    %3 = vector.load %arg3[%c0_1, %c0_2] : memref<256x256xi8, #tpu.memory_space<vmem>>, vector<256x256xi8>
    %4 = arith.sitofp %3 : vector<256x256xi8> to vector<256x256xf32>
    %5 = arith.truncf %4 : vector<256x256xf32> to vector<256x256xbf16>
    %c0_3 = arith.constant 0 : index
    %c0_4 = arith.constant 0 : index
    %6 = vector.load %arg5[%c0_3, %c0_4] : memref<256x32xbf16, #tpu.memory_space<vmem>>, vector<256x32xbf16>
    %cst = arith.constant dense<0.000000e+00> : vector<256x32xf32>
    %7 = tpu.matmul %2, %6, %cst {dimension_numbers = #tpu.dot_dimension_numbers<[1], [0], [0], [1], [0, 0, 1, 1], [], []>} : vector<256x256xbf16>, vector<256x32xbf16>, vector<256x32xf32> -> vector<256x32xf32>
    %c0_5 = arith.constant 0 : index
    %c0_6 = arith.constant 0 : index
    %8 = vector.load %arg2[%c0_5, %c0_6] : memref<256x1xf32, #tpu.memory_space<vmem>>, vector<256x1xf32>
    %9 = vector.broadcast %8 : vector<256x1xf32> to vector<256x32xf32>
    %10 = arith.mulf %7, %9 : vector<256x32xf32>
    %c0_7 = arith.constant 0 : index
    %c0_8 = arith.constant 0 : index
    %11 = vector.load %arg6[%c0_7, %c0_8] : memref<256x32xbf16, #tpu.memory_space<vmem>>, vector<256x32xbf16>
    %cst_9 = arith.constant dense<0.000000e+00> : vector<256x32xf32>
    %12 = tpu.matmul %5, %11, %cst_9 {dimension_numbers = #tpu.dot_dimension_numbers<[1], [0], [0], [1], [0, 0, 1, 1], [], []>} : vector<256x256xbf16>, vector<256x32xbf16>, vector<256x32xf32> -> vector<256x32xf32>
    %c0_10 = arith.constant 0 : index
    %c0_11 = arith.constant 0 : index
    %13 = vector.load %arg4[%c0_10, %c0_11] : memref<256x1xf32, #tpu.memory_space<vmem>>, vector<256x1xf32>
    %14 = vector.broadcast %13 : vector<256x1xf32> to vector<256x32xf32>
    %15 = arith.mulf %12, %14 : vector<256x32xf32>
    %c0_12 = arith.constant 0 : index
    %c0_13 = arith.constant 0 : index
    %16 = vector.load %arg7[%c0_12, %c0_13] : memref<1x64xf32, #tpu.memory_space<vmem>>, vector<1x64xf32>
    %c0_14 = arith.constant 0 : index
    %c0_15 = arith.constant 0 : index
    %17 = vector.load %arg8[%c0_14, %c0_15] : memref<64x32xf32, #tpu.memory_space<vmem>>, vector<64x32xf32>
    %c0_16 = arith.constant 0 : index
    %c0_17 = arith.constant 0 : index
    %18 = vector.load %arg9[%c0_16, %c0_17] : memref<1x32xf32, #tpu.memory_space<vmem>>, vector<1x32xf32>
    %19 = tpu.concatenate %10, %15 in 1 : vector<256x32xf32>, vector<256x32xf32> -> vector<256x64xf32>
    %20 = vector.broadcast %16 : vector<1x64xf32> to vector<256x64xf32>
    %21 = arith.addf %19, %20 : vector<256x64xf32>
    %cst_18 = arith.constant 0.000000e+00 : f32
    %22 = vector.broadcast %cst_18 : f32 to vector<256x64xf32>
    %23 = arith.maximumf %21, %22 : vector<256x64xf32>
    %cst_19 = arith.constant dense<0.000000e+00> : vector<256x32xf32>
    %24 = tpu.matmul %23, %17, %cst_19 {dimension_numbers = #tpu.dot_dimension_numbers<[1], [0], [0], [1], [0, 0, 1, 1], [], []>} : vector<256x64xf32>, vector<64x32xf32>, vector<256x32xf32> -> vector<256x32xf32>
    %25 = vector.broadcast %18 : vector<1x32xf32> to vector<256x32xf32>
    %26 = arith.addf %24, %25 : vector<256x32xf32>
    %cst_20 = arith.constant 0.000000e+00 : f32
    %27 = vector.broadcast %cst_20 : f32 to vector<256x32xf32>
    %28 = arith.maximumf %26, %27 : vector<256x32xf32>
    %29 = arith.truncf %28 : vector<256x32xf32> to vector<256x32xbf16>
    %cst_21 = arith.constant dense<0.000000e+00> : vector<256x32xf32>
    %30 = tpu.matmul %2, %29, %cst_21 {dimension_numbers = #tpu.dot_dimension_numbers<[1], [0], [0], [1], [0, 0, 1, 1], [], []>} : vector<256x256xbf16>, vector<256x32xbf16>, vector<256x32xf32> -> vector<256x32xf32>
    %c0_22 = arith.constant 0 : index
    %c0_23 = arith.constant 0 : index
    %31 = vector.load %arg2[%c0_22, %c0_23] : memref<256x1xf32, #tpu.memory_space<vmem>>, vector<256x1xf32>
    %32 = vector.broadcast %31 : vector<256x1xf32> to vector<256x32xf32>
    %33 = arith.mulf %30, %32 : vector<256x32xf32>
    %c0_24 = arith.constant 0 : index
    %c0_25 = arith.constant 0 : index
    %34 = vector.load %arg10[%c0_24, %c0_25] : memref<32x128xf32, #tpu.memory_space<vmem>>, vector<32x128xf32>
    %cst_26 = arith.constant dense<0.000000e+00> : vector<256x128xf32>
    %35 = tpu.matmul %33, %34, %cst_26 {dimension_numbers = #tpu.dot_dimension_numbers<[1], [0], [0], [1], [0, 0, 1, 1], [], []>} : vector<256x32xf32>, vector<32x128xf32>, vector<256x128xf32> -> vector<256x128xf32>
    %c0_27 = arith.constant 0 : index
    %c0_28 = arith.constant 0 : index
    %36 = vector.load %arg11[%c0_27, %c0_28] : memref<1x128xf32, #tpu.memory_space<vmem>>, vector<1x128xf32>
    %37 = vector.broadcast %36 : vector<1x128xf32> to vector<256x128xf32>
    %38 = arith.addf %35, %37 : vector<256x128xf32>
    %39 = arith.negf %38 : vector<256x128xf32>
    %40 = math.exp %39 : vector<256x128xf32>
    %cst_29 = arith.constant 1.000000e+00 : f32
    %41 = vector.broadcast %cst_29 : f32 to vector<256x128xf32>
    %42 = arith.addf %41, %40 : vector<256x128xf32>
    %43 = arith.divf %41, %42 : vector<256x128xf32>
    %c0_30 = arith.constant 0 : index
    %c0_31 = arith.constant 0 : index
    %44 = vector.load %arg12[%c0_30, %c0_31] : memref<256x128xf32, #tpu.memory_space<vmem>>, vector<256x128xf32>
    tpu.vector_store %arg12[%c0_30, %c0_31], %43 {strides = array<i32>} : memref<256x128xf32, #tpu.memory_space<vmem>>, vector<256x128xf32>,
    return
  }
  func.func @transform_0(%arg0: i32) -> (i32, i32) {
    %c0_i32 = arith.constant 0 : i32
    %c0_i32_0 = arith.constant 0 : i32
    %c0_i32_1 = arith.constant 0 : i32
    return %c0_i32, %c0_i32_0 : i32, i32
  }
  func.func @transform_1(%arg0: i32) -> (i32, i32) {
    %c0_i32 = arith.constant 0 : i32
    %c0_i32_0 = arith.constant 0 : i32
    %c0_i32_1 = arith.constant 0 : i32
    return %c0_i32, %c0_i32_0 : i32, i32
  }
  func.func @transform_2(%arg0: i32) -> (i32, i32) {
    %c0_i32 = arith.constant 0 : i32
    %c0_i32_0 = arith.constant 0 : i32
    %c0_i32_1 = arith.constant 0 : i32
    return %c0_i32, %c0_i32_0 : i32, i32
  }
  func.func @transform_3(%arg0: i32) -> (i32, i32) {
    %c0_i32 = arith.constant 0 : i32
    %c0_i32_0 = arith.constant 0 : i32
    %c0_i32_1 = arith.constant 0 : i32
    return %c0_i32, %c0_i32_0 : i32, i32
  }
  func.func @transform_4(%arg0: i32) -> (i32, i32) {
    %c0_i32 = arith.constant 0 : i32
    %c0_i32_0 = arith.constant 0 : i32
    %c0_i32_1 = arith.constant 0 : i32
    return %c0_i32, %c0_i32_0 : i32, i32
  }
  func.func @transform_5(%arg0: i32) -> (i32, i32) {
    %c0_i32 = arith.constant 0 : i32
    %c0_i32_0 = arith.constant 0 : i32
    %c0_i32_1 = arith.constant 0 : i32
    return %c0_i32, %c0_i32_0 : i32, i32
  }
  func.func @transform_6(%arg0: i32) -> (i32, i32) {
    %c0_i32 = arith.constant 0 : i32
    %c0_i32_0 = arith.constant 0 : i32
    %c0_i32_1 = arith.constant 0 : i32
    return %c0_i32, %c0_i32_0 : i32, i32
  }
  func.func @transform_7(%arg0: i32) -> (i32, i32) {
    %c0_i32 = arith.constant 0 : i32
    %c0_i32_0 = arith.constant 0 : i32
    %c0_i32_1 = arith.constant 0 : i32
    return %c0_i32, %c0_i32_0 : i32, i32
  }
  func.func @transform_8(%arg0: i32) -> (i32, i32) {
    %c0_i32 = arith.constant 0 : i32
    %c0_i32_0 = arith.constant 0 : i32
    %c0_i32_1 = arith.constant 0 : i32
    return %c0_i32, %c0_i32_0 : i32, i32
  }
  func.func @transform_9(%arg0: i32) -> (i32, i32) {
    %c0_i32 = arith.constant 0 : i32
    %c0_i32_0 = arith.constant 0 : i32
    %c0_i32_1 = arith.constant 0 : i32
    return %c0_i32, %c0_i32_0 : i32, i32
  }
  func.func @transform_10(%arg0: i32) -> (i32, i32) {
    %c0_i32 = arith.constant 0 : i32
    %c0_i32_0 = arith.constant 0 : i32
    %c0_i32_1 = arith.constant 0 : i32
    return %c0_i32, %c0_i32_0 : i32, i32
  }
  func.func @transform_11(%arg0: i32) -> (i32, i32) {
    %c0_i32 = arith.constant 0 : i32
    %c0_i32_0 = arith.constant 0 : i32
    %c0_i32_1 = arith.constant 0 : i32
    return %c0_i32, %c0_i32_0 : i32, i32
  }
}

</mosaic_0001>

<llo_original>
// kernel: faultgnn_forward.1
$region0: #{faultgnn_forward.1}
  #allocation0 [shape = 'u32[]', space=smem, size = 0x4, offset = 0x4, fixed_abs, tag = 'smem constant byte address 0x4 - core index']
  #allocation1 [shape = 'u32[72,128]{1,0:T(1,128)}', space=vmem, size = 0x9000, scoped, tag = 'internal scratch']
  %s0 = inlined_call_operand.vmem [shape: s8[256,256], index: 0, kind: input, shape index: {}]
  %s1 = inlined_call_operand.vmem [shape: f32[256,1], index: 1, kind: input, shape index: {}]
  %s2 = inlined_call_operand.vmem [shape: s8[256,256], index: 2, kind: input, shape index: {}]
  %s3 = inlined_call_operand.vmem [shape: f32[256,1], index: 3, kind: input, shape index: {}]
  %s4 = inlined_call_operand.vmem [shape: bf16[256,32], index: 4, kind: input, shape index: {}]
  %s5 = inlined_call_operand.vmem [shape: bf16[256,32], index: 5, kind: input, shape index: {}]
  %s6 = inlined_call_operand.vmem [shape: f32[1,64], index: 6, kind: input, shape index: {}]
  %s7 = inlined_call_operand.vmem [shape: f32[64,32], index: 7, kind: input, shape index: {}]
  %s8 = inlined_call_operand.vmem [shape: f32[1,32], index: 8, kind: input, shape index: {}]
  %s9 = inlined_call_operand.vmem [shape: f32[32,128], index: 9, kind: input, shape index: {}]
  %s10 = inlined_call_operand.vmem [shape: f32[1,128], index: 10, kind: input, shape index: {}]
  %s11 = inlined_call_operand.vmem [shape: f32[256,128], index: 11, kind: output, shape index: {}]
  %s12 = sld [smem:[#allocation0]]
  $region54: #{faultgnn_forward.1} parent=0
    _
  %s14 = ssub.s32 1, %s12
  %s15 = scalar_select 0, %s14, %s12
  // Predicated region
  $region2: #{faultgnn_forward.1} parent=0 // pred_check
    _
  $region3: #{faultgnn_forward.1} parent=0 // pred_check_branch
    %17 = sbr.rel (0) target = $region5
  $region4: #{faultgnn_forward.1} parent=0 // pred_region
    _
  $region5: #{faultgnn_forward.1} parent=0 // pred_fallthru
    _
  // Predicated region
  $region6: #{faultgnn_forward.1} parent=0 // pred_check
    _
  $region7: #{faultgnn_forward.1} parent=0 // pred_check_branch
    %19 = sbr.rel (0) target = $region9
  $region8: #{faultgnn_forward.1} parent=0 // pred_region
    _
  $region9: #{faultgnn_forward.1} parent=0 // pred_fallthru
    _
  // Predicated region
  $region10: #{faultgnn_forward.1} parent=0 // pred_check
    _
  $region11: #{faultgnn_forward.1} parent=0 // pred_check_branch
    %21 = sbr.rel (0) target = $region13
  $region12: #{faultgnn_forward.1} parent=0 // pred_region
    _
  $region13: #{faultgnn_forward.1} parent=0 // pred_fallthru
    _
  // Predicated region
  $region14: #{faultgnn_forward.1} parent=0 // pred_check
    _
  $region15: #{faultgnn_forward.1} parent=0 // pred_check_branch
    %23 = sbr.rel (0) target = $region17
  $region16: #{faultgnn_forward.1} parent=0 // pred_region
    _
  $region17: #{faultgnn_forward.1} parent=0 // pred_fallthru
    _
  // Predicated region
  $region18: #{faultgnn_forward.1} parent=0 // pred_check
    _
  $region19: #{faultgnn_forward.1} parent=0 // pred_check_branch
    %25 = sbr.rel (0) target = $region21
  $region20: #{faultgnn_forward.1} parent=0 // pred_region
    _
  $region21: #{faultgnn_forward.1} parent=0 // pred_fallthru
    _
  // Predicated region
  $region22: #{faultgnn_forward.1} parent=0 // pred_check
    _
  $region23: #{faultgnn_forward.1} parent=0 // pred_check_branch
    %27 = sbr.rel (0) target = $region25
  $region24: #{faultgnn_forward.1} parent=0 // pred_region
    _
  $region25: #{faultgnn_forward.1} parent=0 // pred_fallthru
    _
  // Predicated region
  $region26: #{faultgnn_forward.1} parent=0 // pred_check
    _
  $region27: #{faultgnn_forward.1} parent=0 // pred_check_branch
    %29 = sbr.rel (0) target = $region29
  $region28: #{faultgnn_forward.1} parent=0 // pred_region
    _
  $region29: #{faultgnn_forward.1} parent=0 // pred_fallthru
    _
  // Predicated region
  $region30: #{faultgnn_forward.1} parent=0 // pred_check
    _
  $region31: #{faultgnn_forward.1} parent=0 // pred_check_branch
    %31 = sbr.rel (0) target = $region33
  $region32: #{faultgnn_forward.1} parent=0 // pred_region
    _
  $region33: #{faultgnn_forward.1} parent=0 // pred_fallthru
    _
  // Predicated region
  $region34: #{faultgnn_forward.1} parent=0 // pred_check
    _
  $region35: #{faultgnn_forward.1} parent=0 // pred_check_branch
    %33 = sbr.rel (0) target = $region37
  $region36: #{faultgnn_forward.1} parent=0 // pred_region
    _
  $region37: #{faultgnn_forward.1} parent=0 // pred_fallthru
    _
  // Predicated region
  $region38: #{faultgnn_forward.1} parent=0 // pred_check
    _
  $region39: #{faultgnn_forward.1} parent=0 // pred_check_branch
    %35 = sbr.rel (0) target = $region41
  $region40: #{faultgnn_forward.1} parent=0 // pred_region
    _
  $region41: #{faultgnn_forward.1} parent=0 // pred_fallthru
    _
  // Predicated region
  $region42: #{faultgnn_forward.1} parent=0 // pred_check
    _
  $region43: #{faultgnn_forward.1} parent=0 // pred_check_branch
    %37 = sbr.rel (0) target = $region45
  $region44: #{faultgnn_forward.1} parent=0 // pred_region
    _
  $region45: #{faultgnn_forward.1} parent=0 // pred_fallthru
    _
  %v38 = vld [vmem:[%s0] sm:$0xff]
  %v39 = vld [vmem:[%s0 + $0x8] sm:$0xff]
  %v40 = vld [vmem:[%s0 + $0x10] sm:$0xff]
  %v41 = vld [vmem:[%s0 + $0x18] sm:$0xff]
  %v42 = vld [vmem:[%s0 + $0x20] sm:$0xff]
  %v43 = vld [vmem:[%s0 + $0x28] sm:$0xff]
  %v44 = vld [vmem:[%s0 + $0x30] sm:$0xff]
  %v45 = vld [vmem:[%s0 + $0x38] sm:$0xff]
  %v46 = vld [vmem:[%s0 + $0x40] sm:$0xff]
  %v47 = vld [vmem:[%s0 + $0x48] sm:$0xff]
  %v48 = vld [vmem:[%s0 + $0x50] sm:$0xff]
  %v49 = vld [vmem:[%s0 + $0x58] sm:$0xff]
  %v50 = vld [vmem:[%s0 + $0x60] sm:$0xff]
  %v51 = vld [vmem:[%s0 + $0x68] sm:$0xff]
  %v52 = vld [vmem:[%s0 + $0x70] sm:$0xff]
  %v53 = vld [vmem:[%s0 + $0x78] sm:$0xff]
  %v54 = vunpack.c.0.s8 %v38
  %v55 = vunpack.c.0.s8 %v39
  %v56 = vunpack.c.1.s8 %v38
  %v57 = vunpack.c.1.s8 %v39
  %v58 = vunpack.c.2.s8 %v38
  %v59 = vunpack.c.2.s8 %v39
  %v60 = vunpack.c.3.s8 %v38
  %v61 = vunpack.c.3.s8 %v39
  %v62 = vunpack.c.0.s8 %v40
  %v63 = vunpack.c.0.s8 %v41
  %v64 = vunpack.c.1.s8 %v40
  %v65 = vunpack.c.1.s8 %v41
  %v66 = vunpack.c.2.s8 %v40
  %v67 = vunpack.c.2.s8 %v41
  %v68 = vunpack.c.3.s8 %v40
  %v69 = vunpack.c.3.s8 %v41
  %v70 = vunpack.c.0.s8 %v42
  %v71 = vunpack.c.0.s8 %v43
  %v72 = vunpack.c.1.s8 %v42
  %v73 = vunpack.c.1.s8 %v43
  %v74 = vunpack.c.2.s8 %v42
  %v75 = vunpack.c.2.s8 %v43
  %v76 = vunpack.c.3.s8 %v42
  %v77 = vunpack.c.3.s8 %v43
  %v78 = vunpack.c.0.s8 %v44
  %v79 = vunpack.c.0.s8 %v45
  %v80 = vunpack.c.1.s8 %v44
  %v81 = vunpack.c.1.s8 %v45
  %v82 = vunpack.c.2.s8 %v44
  %v83 = vunpack.c.2.s8 %v45
  %v84 = vunpack.c.3.s8 %v44
  %v85 = vunpack.c.3.s8 %v45
  %v86 = vunpack.c.0.s8 %v46
  %v87 = vunpack.c.0.s8 %v47
  %v88 = vunpack.c.1.s8 %v46
  %v89 = vunpack.c.1.s8 %v47
  %v90 = vunpack.c.2.s8 %v46
  %v91 = vunpack.c.2.s8 %v47
  %v92 = vunpack.c.3.s8 %v46
  %v93 = vunpack.c.3.s8 %v47
  %v94 = vunpack.c.0.s8 %v48
  %v95 = vunpack.c.0.s8 %v49
  %v96 = vunpack.c.1.s8 %v48
  %v97 = vunpack.c.1.s8 %v49
  %v98 = vunpack.c.2.s8 %v48
  %v99 = vunpack.c.2.s8 %v49
  %v100 = vunpack.c.3.s8 %v48
  %v101 = vunpack.c.3.s8 %v49
  %v102 = vunpack.c.0.s8 %v50
  %v103 = vunpack.c.0.s8 %v51
  %v104 = vunpack.c.1.s8 %v50
  %v105 = vunpack.c.1.s8 %v51
  %v106 = vunpack.c.2.s8 %v50
  %v107 = vunpack.c.2.s8 %v51
  %v108 = vunpack.c.3.s8 %v50
  %v109 = vunpack.c.3.s8 %v51
  %v110 = vunpack.c.0.s8 %v52
  %v111 = vunpack.c.0.s8 %v53
  %v112 = vunpack.c.1.s8 %v52
  %v113 = vunpack.c.1.s8 %v53
  %v114 = vunpack.c.2.s8 %v52
  %v115 = vunpack.c.2.s8 %v53
  %v116 = vunpack.c.3.s8 %v52
  %v117 = vunpack.c.3.s8 %v53
  %v118 = vcvt.s32.f32 %v54
  %v119 = vcvt.s32.f32 %v55
  %v120 = vcvt.s32.f32 %v56
  %v121 = vcvt.s32.f32 %v57
  %v122 = vcvt.s32.f32 %v58
  %v123 = vcvt.s32.f32 %v59
  %v124 = vcvt.s32.f32 %v60
  %v125 = vcvt.s32.f32 %v61
  %v126 = vcvt.s32.f32 %v62
  %v127 = vcvt.s32.f32 %v63
  %v128 = vcvt.s32.f32 %v64
  %v129 = vcvt.s32.f32 %v65
  %v130 = vcvt.s32.f32 %v66
  %v131 = vcvt.s32.f32 %v67
  %v132 = vcvt.s32.f32 %v68
  %v133 = vcvt.s32.f32 %v69
  %v134 = vcvt.s32.f32 %v70
  %v135 = vcvt.s32.f32 %v71
  %v136 = vcvt.s32.f32 %v72
  %v137 = vcvt.s32.f32 %v73
  %v138 = vcvt.s32.f32 %v74
  %v139 = vcvt.s32.f32 %v75
  %v140 = vcvt.s32.f32 %v76
  %v141 = vcvt.s32.f32 %v77
  %v142 = vcvt.s32.f32 %v78
  %v143 = vcvt.s32.f32 %v79
  %v144 = vcvt.s32.f32 %v80
  %v145 = vcvt.s32.f32 %v81
  %v146 = vcvt.s32.f32 %v82
  %v147 = vcvt.s32.f32 %v83
  %v148 = vcvt.s32.f32 %v84
  %v149 = vcvt.s32.f32 %v85
  %v150 = vcvt.s32.f32 %v86
  %v151 = vcvt.s32.f32 %v87
  %v152 = vcvt.s32.f32 %v88
  %v153 = vcvt.s32.f32 %v89
  %v154 = vcvt.s32.f32 %v90
  %v155 = vcvt.s32.f32 %v91
  %v156 = vcvt.s32.f32 %v92
  %v157 = vcvt.s32.f32 %v93
  %v158 = vcvt.s32.f32 %v94
  %v159 = vcvt.s32.f32 %v95
  %v160 = vcvt.s32.f32 %v96
  %v161 = vcvt.s32.f32 %v97
  %v162 = vcvt.s32.f32 %v98
  %v163 = vcvt.s32.f32 %v99
  %v164 = vcvt.s32.f32 %v100
  %v165 = vcvt.s32.f32 %v101
  %v166 = vcvt.s32.f32 %v102
  %v167 = vcvt.s32.f32 %v103
  %v168 = vcvt.s32.f32 %v104
  %v169 = vcvt.s32.f32 %v105
  %v170 = vcvt.s32.f32 %v106
  %v171 = vcvt.s32.f32 %v107
  %v172 = vcvt.s32.f32 %v108
  %v173 = vcvt.s32.f32 %v109
  %v174 = vcvt.s32.f32 %v110
  %v175 = vcvt.s32.f32 %v111
  %v176 = vcvt.s32.f32 %v112
  %v177 = vcvt.s32.f32 %v113
  %v178 = vcvt.s32.f32 %v114
  %v179 = vcvt.s32.f32 %v115
  %v180 = vcvt.s32.f32 %v116
  %v181 = vcvt.s32.f32 %v117
  %v182 = vpack.c.bf16 %v120, %v118
  %v183 = vpack.c.bf16 %v121, %v119
  %v184 = vpack.c.bf16 %v124, %v122
  %v185 = vpack.c.bf16 %v125, %v123
  %v186 = vpack.c.bf16 %v128, %v126
  %v187 = vpack.c.bf16 %v129, %v127
  %v188 = vpack.c.bf16 %v132, %v130
  %v189 = vpack.c.bf16 %v133, %v131
  %v190 = vpack.c.bf16 %v136, %v134
  %v191 = vpack.c.bf16 %v137, %v135
  %v192 = vpack.c.bf16 %v140, %v138
  %v193 = vpack.c.bf16 %v141, %v139
  %v194 = vpack.c.bf16 %v144, %v142
  %v195 = vpack.c.bf16 %v145, %v143
  %v196 = vpack.c.bf16 %v148, %v146
  %v197 = vpack.c.bf16 %v149, %v147
  %v198 = vpack.c.bf16 %v152, %v150
  %v199 = vpack.c.bf16 %v153, %v151
  %v200 = vpack.c.bf16 %v156, %v154
  %v201 = vpack.c.bf16 %v157, %v155
  %v202 = vpack.c.bf16 %v160, %v158
  %v203 = vpack.c.bf16 %v161, %v159
  %v204 = vpack.c.bf16 %v164, %v162
  %v205 = vpack.c.bf16 %v165, %v163
  %v206 = vpack.c.bf16 %v168, %v166
  %v207 = vpack.c.bf16 %v169, %v167
  %v208 = vpack.c.bf16 %v172, %v170
  %v209 = vpack.c.bf16 %v173, %v171
  %v210 = vpack.c.bf16 %v176, %v174
  %v211 = vpack.c.bf16 %v177, %v175
  %v212 = vpack.c.bf16 %v180, %v178
  %v213 = vpack.c.bf16 %v181, %v179
  %v214 = vld [vmem:[%s2] sm:$0xff]
  %v215 = vld [vmem:[%s2 + $0x8] sm:$0xff]
  %v216 = vld [vmem:[%s2 + $0x10] sm:$0xff]
  %v217 = vld [vmem:[%s2 + $0x18] sm:$0xff]
  %v218 = vld [vmem:[%s2 + $0x20] sm:$0xff]
  %v219 = vld [vmem:[%s2 + $0x28] sm:$0xff]
  %v220 = vld [vmem:[%s2 + $0x30] sm:$0xff]
  %v221 = vld [vmem:[%s2 + $0x38] sm:$0xff]
  %v222 = vld [vmem:[%s2 + $0x40] sm:$0xff]
  %v223 = vld [vmem:[%s2 + $0x48] sm:$0xff]
  %v224 = vld [vmem:[%s2 + $0x50] sm:$0xff]
  %v225 = vld [vmem:[%s2 + $0x58] sm:$0xff]
  %v226 = vld [vmem:[%s2 + $0x60] sm:$0xff]
  %v227 = vld [vmem:[%s2 + $0x68] sm:$0xff]
  %v228 = vld [vmem:[%s2 + $0x70] sm:$0xff]
  %v229 = vld [vmem:[%s2 + $0x78] sm:$0xff]
  %v230 = vunpack.c.0.s8 %v214
  %v231 = vunpack.c.0.s8 %v215
  %v232 = vunpack.c.1.s8 %v214
  %v233 = vunpack.c.1.s8 %v215
  %v234 = vunpack.c.2.s8 %v214
  %v235 = vunpack.c.2.s8 %v215
  %v236 = vunpack.c.3.s8 %v214
  %v237 = vunpack.c.3.s8 %v215
  %v238 = vunpack.c.0.s8 %v216
  %v239 = vunpack.c.0.s8 %v217
  %v240 = vunpack.c.1.s8 %v216
  %v241 = vunpack.c.1.s8 %v217
  %v242 = vunpack.c.2.s8 %v216
  %v243 = vunpack.c.2.s8 %v217
  %v244 = vunpack.c.3.s8 %v216
  %v245 = vunpack.c.3.s8 %v217
  %v246 = vunpack.c.0.s8 %v218
  %v247 = vunpack.c.0.s8 %v219
  %v248 = vunpack.c.1.s8 %v218
  %v249 = vunpack.c.1.s8 %v219
  %v250 = vunpack.c.2.s8 %v218
  %v251 = vunpack.c.2.s8 %v219
  %v252 = vunpack.c.3.s8 %v218
  %v253 = vunpack.c.3.s8 %v219
  %v254 = vunpack.c.0.s8 %v220
  %v255 = vunpack.c.0.s8 %v221
  %v256 = vunpack.c.1.s8 %v220
  %v257 = vunpack.c.1.s8 %v221
  %v258 = vunpack.c.2.s8 %v220
  %v259 = vunpack.c.2.s8 %v221
  %v260 = vunpack.c.3.s8 %v220
  %v261 = vunpack.c.3.s8 %v221
  %v262 = vunpack.c.0.s8 %v222
  %v263 = vunpack.c.0.s8 %v223
  %v264 = vunpack.c.1.s8 %v222
  %v265 = vunpack.c.1.s8 %v223
  %v266 = vunpack.c.2.s8 %v222
  %v267 = vunpack.c.2.s8 %v223
  %v268 = vunpack.c.3.s8 %v222
  %v269 = vunpack.c.3.s8 %v223
  %v270 = vunpack.c.0.s8 %v224
  %v271 = vunpack.c.0.s8 %v225
  %v272 = vunpack.c.1.s8 %v224
  %v273 = vunpack.c.1.s8 %v225
  %v274 = vunpack.c.2.s8 %v224
  %v275 = vunpack.c.2.s8 %v225
  %v276 = vunpack.c.3.s8 %v224
  %v277 = vunpack.c.3.s8 %v225
  %v278 = vunpack.c.0.s8 %v226
  %v279 = vunpack.c.0.s8 %v227
  %v280 = vunpack.c.1.s8 %v226
  %v281 = vunpack.c.1.s8 %v227
  %v282 = vunpack.c.2.s8 %v226
  %v283 = vunpack.c.2.s8 %v227
  %v284 = vunpack.c.3.s8 %v226
  %v285 = vunpack.c.3.s8 %v227
  %v286 = vunpack.c.0.s8 %v228
  %v287 = vunpack.c.0.s8 %v229
  %v288 = vunpack.c.1.s8 %v228
  %v289 = vunpack.c.1.s8 %v229
  %v290 = vunpack.c.2.s8 %v228
  %v291 = vunpack.c.2.s8 %v229
  %v292 = vunpack.c.3.s8 %v228
  %v293 = vunpack.c.3.s8 %v229
  %v294 = vcvt.s32.f32 %v230
  %v295 = vcvt.s32.f32 %v231
  %v296 = vcvt.s32.f32 %v232
  %v297 = vcvt.s32.f32 %v233
  %v298 = vcvt.s32.f32 %v234
  %v299 = vcvt.s32.f32 %v235
  %v300 = vcvt.s32.f32 %v236
  %v301 = vcvt.s32.f32 %v237
  %v302 = vcvt.s32.f32 %v238
  %v303 = vcvt.s32.f32 %v239
  %v304 = vcvt.s32.f32 %v240
  %v305 = vcvt.s32.f32 %v241
  %v306 = vcvt.s32.f32 %v242
  %v307 = vcvt.s32.f32 %v243
  %v308 = vcvt.s32.f32 %v244
  %v309 = vcvt.s32.f32 %v245
  %v310 = vcvt.s32.f32 %v246
  %v311 = vcvt.s32.f32 %v247
  %v312 = vcvt.s32.f32 %v248
  %v313 = vcvt.s32.f32 %v249
  %v314 = vcvt.s32.f32 %v250
  %v315 = vcvt.s32.f32 %v251
  %v316 = vcvt.s32.f32 %v252
  %v317 = vcvt.s32.f32 %v253
  %v318 = vcvt.s32.f32 %v254
  %v319 = vcvt.s32.f32 %v255
  %v320 = vcvt.s32.f32 %v256
  %v321 = vcvt.s32.f32 %v257
  %v322 = vcvt.s32.f32 %v258
  %v323 = vcvt.s32.f32 %v259
  %v324 = vcvt.s32.f32 %v260
  %v325 = vcvt.s32.f32 %v261
  %v326 = vcvt.s32.f32 %v262
  %v327 = vcvt.s32.f32 %v263
  %v328 = vcvt.s32.f32 %v264
  %v329 = vcvt.s32.f32 %v265
  %v330 = vcvt.s32.f32 %v266
  %v331 = vcvt.s32.f32 %v267
  %v332 = vcvt.s32.f32 %v268
  %v333 = vcvt.s32.f32 %v269
  %v334 = vcvt.s32.f32 %v270
  %v335 = vcvt.s32.f32 %v271
  %v336 = vcvt.s32.f32 %v272
  %v337 = vcvt.s32.f32 %v273
  %v338 = vcvt.s32.f32 %v274
  %v339 = vcvt.s32.f32 %v275
  %v340 = vcvt.s32.f32 %v276
  %v341 = vcvt.s32.f32 %v277
  %v342 = vcvt.s32.f32 %v278
  %v343 = vcvt.s32.f32 %v279
  %v344 = vcvt.s32.f32 %v280
  %v345 = vcvt.s32.f32 %v281
  %v346 = vcvt.s32.f32 %v282
  %v347 = vcvt.s32.f32 %v283
  %v348 = vcvt.s32.f32 %v284
  %v349 = vcvt.s32.f32 %v285
  %v350 = vcvt.s32.f32 %v286
  %v351 = vcvt.s32.f32 %v287
  %v352 = vcvt.s32.f32 %v288
  %v353 = vcvt.s32.f32 %v289
  %v354 = vcvt.s32.f32 %v290
  %v355 = vcvt.s32.f32 %v291
  %v356 = vcvt.s32.f32 %v292
  %v357 = vcvt.s32.f32 %v293
  %v358 = vpack.c.bf16 %v296, %v294
  %v359 = vpack.c.bf16 %v297, %v295
  %v360 = vpack.c.bf16 %v300, %v298
  %v361 = vpack.c.bf16 %v301, %v299
  %v362 = vpack.c.bf16 %v304, %v302
  %v363 = vpack.c.bf16 %v305, %v303
  %v364 = vpack.c.bf16 %v308, %v306
  %v365 = vpack.c.bf16 %v309, %v307
  %v366 = vpack.c.bf16 %v312, %v310
  %v367 = vpack.c.bf16 %v313, %v311
  %v368 = vpack.c.bf16 %v316, %v314
  %v369 = vpack.c.bf16 %v317, %v315
  %v370 = vpack.c.bf16 %v320, %v318
  %v371 = vpack.c.bf16 %v321, %v319
  %v372 = vpack.c.bf16 %v324, %v322
  %v373 = vpack.c.bf16 %v325, %v323
  %v374 = vpack.c.bf16 %v328, %v326
  %v375 = vpack.c.bf16 %v329, %v327
  %v376 = vpack.c.bf16 %v332, %v330
  %v377 = vpack.c.bf16 %v333, %v331
  %v378 = vpack.c.bf16 %v336, %v334
  %v379 = vpack.c.bf16 %v337, %v335
  %v380 = vpack.c.bf16 %v340, %v338
  %v381 = vpack.c.bf16 %v341, %v339
  %v382 = vpack.c.bf16 %v344, %v342
  %v383 = vpack.c.bf16 %v345, %v343
  %v384 = vpack.c.bf16 %v348, %v346
  %v385 = vpack.c.bf16 %v349, %v347
  %v386 = vpack.c.bf16 %v352, %v350
  %v387 = vpack.c.bf16 %v353, %v351
  %v388 = vpack.c.bf16 %v356, %v354
  %v389 = vpack.c.bf16 %v357, %v355
  %v390 = vld [vmem:[%s4] sm:$0xf]
  %v391 = vld [vmem:[%s4 + $0x4] sm:$0xf]
  %v392 = vld [vmem:[%s4 + $0x8] sm:$0xf]
  %v393 = vld [vmem:[%s4 + $0xc] sm:$0xf]
  %v394 = vld [vmem:[%s4 + $0x10] sm:$0xf]
  %v395 = vld [vmem:[%s4 + $0x14] sm:$0xf]
  %v396 = vld [vmem:[%s4 + $0x18] sm:$0xf]
  %v397 = vld [vmem:[%s4 + $0x1c] sm:$0xf]
  %v398 = vld [vmem:[%s4 + $0x20] sm:$0xf]
  %v399 = vld [vmem:[%s4 + $0x24] sm:$0xf]
  %v400 = vld [vmem:[%s4 + $0x28] sm:$0xf]
  %v401 = vld [vmem:[%s4 + $0x2c] sm:$0xf]
  %v402 = vld [vmem:[%s4 + $0x30] sm:$0xf]
  %v403 = vld [vmem:[%s4 + $0x34] sm:$0xf]
  %v404 = vld [vmem:[%s4 + $0x38] sm:$0xf]
  %v405 = vld [vmem:[%s4 + $0x3c] sm:$0xf]
  %v406 = vld [vmem:[%s4 + $0x40] sm:$0xf]
  %v407 = vld [vmem:[%s4 + $0x44] sm:$0xf]
  %v408 = vld [vmem:[%s4 + $0x48] sm:$0xf]
  %v409 = vld [vmem:[%s4 + $0x4c] sm:$0xf]
  %v410 = vld [vmem:[%s4 + $0x50] sm:$0xf]
  %v411 = vld [vmem:[%s4 + $0x54] sm:$0xf]
  %v412 = vld [vmem:[%s4 + $0x58] sm:$0xf]
  %v413 = vld [vmem:[%s4 + $0x5c] sm:$0xf]
  %v414 = vld [vmem:[%s4 + $0x60] sm:$0xf]
  %v415 = vld [vmem:[%s4 + $0x64] sm:$0xf]
  %v416 = vld [vmem:[%s4 + $0x68] sm:$0xf]
  %v417 = vld [vmem:[%s4 + $0x6c] sm:$0xf]
  %v418 = vld [vmem:[%s4 + $0x70] sm:$0xf]
  %v419 = vld [vmem:[%s4 + $0x74] sm:$0xf]
  %v420 = vld [vmem:[%s4 + $0x78] sm:$0xf]
  %v421 = vld [vmem:[%s4 + $0x7c] sm:$0xf]
  %v454 = vunpack.c.l.b16 %v390
  %v455 = vunpack.c.l.b16 %v391
  %v456 = vunpack.c.l.b16 %v392
  %v457 = vunpack.c.l.b16 %v393
  %v458 = vunpack.c.l.b16 %v394
  %v459 = vunpack.c.l.b16 %v395
  %v460 = vunpack.c.l.b16 %v396
  %v461 = vunpack.c.l.b16 %v397
  %v462 = vunpack.c.l.b16 %v398
  %v463 = vunpack.c.l.b16 %v399
  %v464 = vunpack.c.l.b16 %v400
  %v465 = vunpack.c.l.b16 %v401
  %v466 = vunpack.c.l.b16 %v402
  %v467 = vunpack.c.l.b16 %v403
  %v468 = vunpack.c.l.b16 %v404
  %v469 = vunpack.c.l.b16 %v405
  %v470 = vunpack.c.l.b16 %v406
  %v471 = vunpack.c.l.b16 %v407
  %v472 = vunpack.c.l.b16 %v408
  %v473 = vunpack.c.l.b16 %v409
  %v474 = vunpack.c.l.b16 %v410
  %v475 = vunpack.c.l.b16 %v411
  %v476 = vunpack.c.l.b16 %v412
  %v477 = vunpack.c.l.b16 %v413
  %v478 = vunpack.c.l.b16 %v414
  %v479 = vunpack.c.l.b16 %v415
  %v480 = vunpack.c.l.b16 %v416
  %v481 = vunpack.c.l.b16 %v417
  %v482 = vunpack.c.l.b16 %v418
  %v483 = vunpack.c.l.b16 %v419
  %v484 = vunpack.c.l.b16 %v420
  %v485 = vunpack.c.l.b16 %v421
  %v486 = vpack.c.b16 %v455, %v454
  %v487 = vpack.c.b16 %v457, %v456
  %v488 = vpack.c.b16 %v459, %v458
  %v489 = vpack.c.b16 %v461, %v460
  %v490 = vpack.c.b16 %v463, %v462
  %v491 = vpack.c.b16 %v465, %v464
  %v492 = vpack.c.b16 %v467, %v466
  %v493 = vpack.c.b16 %v469, %v468
  %v494 = vpack.c.b16 %v471, %v470
  %v495 = vpack.c.b16 %v473, %v472
  %v496 = vpack.c.b16 %v475, %v474
  %v497 = vpack.c.b16 %v477, %v476
  %v498 = vpack.c.b16 %v479, %v478
  %v499 = vpack.c.b16 %v481, %v480
  %v500 = vpack.c.b16 %v483, %v482
  %v501 = vpack.c.b16 %v485, %v484
  %518 = vmatpush.bf16.msra.mxu0 %v493
  %519 = vmatpush.bf16.msra.mxu0 %v492
  %520 = vmatpush.bf16.msra.mxu0 %v491
  %521 = vmatpush.bf16.msra.mxu0 %v490
  %522 = vmatpush.bf16.msra.mxu0 %v489
  %523 = vmatpush.bf16.msra.mxu0 %v488
  %524 = vmatpush.bf16.msra.mxu0 %v487
  %525 = vmatpush.bf16.msra.mxu0 %v486
  %526 = vmatmul.bf16.gmra.mxu0 %v182
  %v527 = vpop.f32.mrf.mxu0
  %v528 = vadd.f32 0.0, %v527
  %v529 = vpop.f32.mrf.mxu0
  %v530 = vadd.f32 0.0, %v529
  %531 = vmatmul.bf16.gmra.mxu0 %v184
  %v532 = vpop.f32.mrf.mxu0
  %v533 = vadd.f32 0.0, %v532
  %v534 = vpop.f32.mrf.mxu0
  %v535 = vadd.f32 0.0, %v534
  %536 = vmatmul.bf16.gmra.mxu0 %v186
  %v537 = vpop.f32.mrf.mxu0
  %v538 = vadd.f32 0.0, %v537
  %v539 = vpop.f32.mrf.mxu0
  %v540 = vadd.f32 0.0, %v539
  %541 = vmatmul.bf16.gmra.mxu0 %v188
  %v542 = vpop.f32.mrf.mxu0
  %v543 = vadd.f32 0.0, %v542
  %v544 = vpop.f32.mrf.mxu0
  %v545 = vadd.f32 0.0, %v544
  %546 = vmatmul.bf16.gmra.mxu0 %v190
  %v547 = vpop.f32.mrf.mxu0
  %v548 = vadd.f32 0.0, %v547
  %v549 = vpop.f32.mrf.mxu0
  %v550 = vadd.f32 0.0, %v549
  %551 = vmatmul.bf16.gmra.mxu0 %v192
  %v552 = vpop.f32.mrf.mxu0
  %v553 = vadd.f32 0.0, %v552
  %v554 = vpop.f32.mrf.mxu0
  %v555 = vadd.f32 0.0, %v554
  %556 = vmatmul.bf16.gmra.mxu0 %v194
  %v557 = vpop.f32.mrf.mxu0
  %v558 = vadd.f32 0.0, %v557
  %v559 = vpop.f32.mrf.mxu0
  %v560 = vadd.f32 0.0, %v559
  %561 = vmatmul.bf16.gmra.mxu0 %v196
  %v562 = vpop.f32.mrf.mxu0
  %v563 = vadd.f32 0.0, %v562
  %v564 = vpop.f32.mrf.mxu0
  %v565 = vadd.f32 0.0, %v564
  %566 = vmatmul.bf16.gmra.mxu0 %v198
  %v567 = vpop.f32.mrf.mxu0
  %v568 = vadd.f32 0.0, %v567
  %v569 = vpop.f32.mrf.mxu0
  %v570 = vadd.f32 0.0, %v569
  %571 = vmatmul.bf16.gmra.mxu0 %v200
  %v572 = vpop.f32.mrf.mxu0
  %v573 = vadd.f32 0.0, %v572
  %v574 = vpop.f32.mrf.mxu0
  %v575 = vadd.f32 0.0, %v574
  %576 = vmatmul.bf16.gmra.mxu0 %v202
  %v577 = vpop.f32.mrf.mxu0
  %v578 = vadd.f32 0.0, %v577
  %v579 = vpop.f32.mrf.mxu0
  %v580 = vadd.f32 0.0, %v579
  %581 = vmatmul.bf16.gmra.mxu0 %v204
  %v582 = vpop.f32.mrf.mxu0
  %v583 = vadd.f32 0.0, %v582
  %v584 = vpop.f32.mrf.mxu0
  %v585 = vadd.f32 0.0, %v584
  %586 = vmatmul.bf16.gmra.mxu0 %v206
  %v587 = vpop.f32.mrf.mxu0
  %v588 = vadd.f32 0.0, %v587
  %v589 = vpop.f32.mrf.mxu0
  %v590 = vadd.f32 0.0, %v589
  %591 = vmatmul.bf16.gmra.mxu0 %v208
  %v592 = vpop.f32.mrf.mxu0
  %v593 = vadd.f32 0.0, %v592
  %v594 = vpop.f32.mrf.mxu0
  %v595 = vadd.f32 0.0, %v594
  %596 = vmatmul.bf16.gmra.mxu0 %v210
  %v597 = vpop.f32.mrf.mxu0
  %v598 = vadd.f32 0.0, %v597
  %v599 = vpop.f32.mrf.mxu0
  %v600 = vadd.f32 0.0, %v599
  %601 = vmatmul.bf16.gmra.mxu0 %v212
  %v602 = vpop.f32.mrf.mxu0
  %v603 = vadd.f32 0.0, %v602
  %v604 = vpop.f32.mrf.mxu0
  %v605 = vadd.f32 0.0, %v604
  %606 = vdwg.mxu0
  %607 = vmatpush.bf16.msra.mxu0 %v501
  %608 = vmatpush.bf16.msra.mxu0 %v500
  %609 = vmatpush.bf16.msra.mxu0 %v499
  %610 = vmatpush.bf16.msra.mxu0 %v498
  %611 = vmatpush.bf16.msra.mxu0 %v497
  %612 = vmatpush.bf16.msra.mxu0 %v496
  %613 = vmatpush.bf16.msra.mxu0 %v495
  %614 = vmatpush.bf16.msra.mxu0 %v494
  %615 = vmatmul.bf16.gmra.mxu0 %v183
  %v616 = vpop.f32.mrf.mxu0
  %v617 = vadd.f32 %v528, %v616
  %v618 = vpop.f32.mrf.mxu0
  %v619 = vadd.f32 %v530, %v618
  %620 = vmatmul.bf16.gmra.mxu0 %v185
  %v621 = vpop.f32.mrf.mxu0
  %v622 = vadd.f32 %v533, %v621
  %v623 = vpop.f32.mrf.mxu0
  %v624 = vadd.f32 %v535, %v623
  %625 = vmatmul.bf16.gmra.mxu0 %v187
  %v626 = vpop.f32.mrf.mxu0
  %v627 = vadd.f32 %v538, %v626
  %v628 = vpop.f32.mrf.mxu0
  %v629 = vadd.f32 %v540, %v628
  %630 = vmatmul.bf16.gmra.mxu0 %v189
  %v631 = vpop.f32.mrf.mxu0
  %v632 = vadd.f32 %v543, %v631
  %v633 = vpop.f32.mrf.mxu0
  %v634 = vadd.f32 %v545, %v633
  %635 = vmatmul.bf16.gmra.mxu0 %v191
  %v636 = vpop.f32.mrf.mxu0
  %v637 = vadd.f32 %v548, %v636
  %v638 = vpop.f32.mrf.mxu0
  %v639 = vadd.f32 %v550, %v638
  %640 = vmatmul.bf16.gmra.mxu0 %v193
  %v641 = vpop.f32.mrf.mxu0
  %v642 = vadd.f32 %v553, %v641
  %v643 = vpop.f32.mrf.mxu0
  %v644 = vadd.f32 %v555, %v643
  %645 = vmatmul.bf16.gmra.mxu0 %v195
  %v646 = vpop.f32.mrf.mxu0
  %v647 = vadd.f32 %v558, %v646
  %v648 = vpop.f32.mrf.mxu0
  %v649 = vadd.f32 %v560, %v648
  %650 = vmatmul.bf16.gmra.mxu0 %v197
  %v651 = vpop.f32.mrf.mxu0
  %v652 = vadd.f32 %v563, %v651
  %v653 = vpop.f32.mrf.mxu0
  %v654 = vadd.f32 %v565, %v653
  %655 = vmatmul.bf16.gmra.mxu0 %v199
  %v656 = vpop.f32.mrf.mxu0
  %v657 = vadd.f32 %v568, %v656
  %v658 = vpop.f32.mrf.mxu0
  %v659 = vadd.f32 %v570, %v658
  %660 = vmatmul.bf16.gmra.mxu0 %v201
  %v661 = vpop.f32.mrf.mxu0
  %v662 = vadd.f32 %v573, %v661
  %v663 = vpop.f32.mrf.mxu0
  %v664 = vadd.f32 %v575, %v663
  %665 = vmatmul.bf16.gmra.mxu0 %v203
  %v666 = vpop.f32.mrf.mxu0
  %v667 = vadd.f32 %v578, %v666
  %v668 = vpop.f32.mrf.mxu0
  %v669 = vadd.f32 %v580, %v668
  %670 = vmatmul.bf16.gmra.mxu0 %v205
  %v671 = vpop.f32.mrf.mxu0
  %v672 = vadd.f32 %v583, %v671
  %v673 = vpop.f32.mrf.mxu0
  %v674 = vadd.f32 %v585, %v673
  %675 = vmatmul.bf16.gmra.mxu0 %v207
  %v676 = vpop.f32.mrf.mxu0
  %v677 = vadd.f32 %v588, %v676
  %v678 = vpop.f32.mrf.mxu0
  %v679 = vadd.f32 %v590, %v678
  %680 = vmatmul.bf16.gmra.mxu0 %v209
  %v681 = vpop.f32.mrf.mxu0
  %v682 = vadd.f32 %v593, %v681
  %v683 = vpop.f32.mrf.mxu0
  %v684 = vadd.f32 %v595, %v683
  %685 = vmatmul.bf16.gmra.mxu0 %v211
  %v686 = vpop.f32.mrf.mxu0
  %v687 = vadd.f32 %v598, %v686
  %v688 = vpop.f32.mrf.mxu0
  %v689 = vadd.f32 %v600, %v688
  %690 = vmatmul.bf16.gmra.mxu0 %v213
  %v691 = vpop.f32.mrf.mxu0
  %v692 = vadd.f32 %v603, %v691
  %v693 = vpop.f32.mrf.mxu0
  %v694 = vadd.f32 %v605, %v693
  %695 = vdwg.mxu0
  %v696 = vld [vmem:[%s1] sm:$0xff]
  %v697 = vld [vmem:[%s1 + $0x8] sm:$0xff]
  %v698 = vld [vmem:[%s1 + $0x10] sm:$0xff]
  %v699 = vld [vmem:[%s1 + $0x18] sm:$0xff]
  %v700 = vld [vmem:[%s1 + $0x20] sm:$0xff]
  %v701 = vld [vmem:[%s1 + $0x28] sm:$0xff]
  %v702 = vld [vmem:[%s1 + $0x30] sm:$0xff]
  %v703 = vld [vmem:[%s1 + $0x38] sm:$0xff]
  %v704 = vld [vmem:[%s1 + $0x40] sm:$0xff]
  %v705 = vld [vmem:[%s1 + $0x48] sm:$0xff]
  %v706 = vld [vmem:[%s1 + $0x50] sm:$0xff]
  %v707 = vld [vmem:[%s1 + $0x58] sm:$0xff]
  %v708 = vld [vmem:[%s1 + $0x60] sm:$0xff]
  %v709 = vld [vmem:[%s1 + $0x68] sm:$0xff]
  %v710 = vld [vmem:[%s1 + $0x70] sm:$0xff]
  %v711 = vld [vmem:[%s1 + $0x78] sm:$0xff]
  %v712 = vld [vmem:[%s1 + $0x80] sm:$0xff]
  %v713 = vld [vmem:[%s1 + $0x88] sm:$0xff]
  %v714 = vld [vmem:[%s1 + $0x90] sm:$0xff]
  %v715 = vld [vmem:[%s1 + $0x98] sm:$0xff]
  %v716 = vld [vmem:[%s1 + $0xa0] sm:$0xff]
  %v717 = vld [vmem:[%s1 + $0xa8] sm:$0xff]
  %v718 = vld [vmem:[%s1 + $0xb0] sm:$0xff]
  %v719 = vld [vmem:[%s1 + $0xb8] sm:$0xff]
  %v720 = vld [vmem:[%s1 + $0xc0] sm:$0xff]
  %v721 = vld [vmem:[%s1 + $0xc8] sm:$0xff]
  %v722 = vld [vmem:[%s1 + $0xd0] sm:$0xff]
  %v723 = vld [vmem:[%s1 + $0xd8] sm:$0xff]
  %v724 = vld [vmem:[%s1 + $0xe0] sm:$0xff]
  %v725 = vld [vmem:[%s1 + $0xe8] sm:$0xff]
  %v726 = vld [vmem:[%s1 + $0xf0] sm:$0xff]
  %v727 = vld [vmem:[%s1 + $0xf8] sm:$0xff]
  %729 = vset.pattern.permute.xlu0 0
  %730 = vperm.xlu0 %729, %v696
  %v731 = vpop.permute.xlu0 %730
  %734 = vset.pattern.permute.xlu0 0
  %735 = vperm.xlu0 %734, %v697
  %v736 = vpop.permute.xlu0 %735
  %739 = vset.pattern.permute.xlu0 0
  %740 = vperm.xlu0 %739, %v698
  %v741 = vpop.permute.xlu0 %740
  %744 = vset.pattern.permute.xlu0 0
  %745 = vperm.xlu0 %744, %v699
  %v746 = vpop.permute.xlu0 %745
  %749 = vset.pattern.permute.xlu0 0
  %750 = vperm.xlu0 %749, %v700
  %v751 = vpop.permute.xlu0 %750
  %754 = vset.pattern.permute.xlu0 0
  %755 = vperm.xlu0 %754, %v701
  %v756 = vpop.permute.xlu0 %755
  %759 = vset.pattern.permute.xlu0 0
  %760 = vperm.xlu0 %759, %v702
  %v761 = vpop.permute.xlu0 %760
  %764 = vset.pattern.permute.xlu0 0
  %765 = vperm.xlu0 %764, %v703
  %v766 = vpop.permute.xlu0 %765
  %769 = vset.pattern.permute.xlu0 0
  %770 = vperm.xlu0 %769, %v704
  %v771 = vpop.permute.xlu0 %770
  %774 = vset.pattern.permute.xlu0 0
  %775 = vperm.xlu0 %774, %v705
  %v776 = vpop.permute.xlu0 %775
  %779 = vset.pattern.permute.xlu0 0
  %780 = vperm.xlu0 %779, %v706
  %v781 = vpop.permute.xlu0 %780
  %784 = vset.pattern.permute.xlu0 0
  %785 = vperm.xlu0 %784, %v707
  %v786 = vpop.permute.xlu0 %785
  %789 = vset.pattern.permute.xlu0 0
  %790 = vperm.xlu0 %789, %v708
  %v791 = vpop.permute.xlu0 %790
  %794 = vset.pattern.permute.xlu0 0
  %795 = vperm.xlu0 %794, %v709
  %v796 = vpop.permute.xlu0 %795
  %799 = vset.pattern.permute.xlu0 0
  %800 = vperm.xlu0 %799, %v710
  %v801 = vpop.permute.xlu0 %800
  %804 = vset.pattern.permute.xlu0 0
  %805 = vperm.xlu0 %804, %v711
  %v806 = vpop.permute.xlu0 %805
  %809 = vset.pattern.permute.xlu0 0
  %810 = vperm.xlu0 %809, %v712
  %v811 = vpop.permute.xlu0 %810
  %814 = vset.pattern.permute.xlu0 0
  %815 = vperm.xlu0 %814, %v713
  %v816 = vpop.permute.xlu0 %815
  %819 = vset.pattern.permute.xlu0 0
  %820 = vperm.xlu0 %819, %v714
  %v821 = vpop.permute.xlu0 %820
  %824 = vset.pattern.permute.xlu0 0
  %825 = vperm.xlu0 %824, %v715
  %v826 = vpop.permute.xlu0 %825
  %829 = vset.pattern.permute.xlu0 0
  %830 = vperm.xlu0 %829, %v716
  %v831 = vpop.permute.xlu0 %830
  %834 = vset.pattern.permute.xlu0 0
  %835 = vperm.xlu0 %834, %v717
  %v836 = vpop.permute.xlu0 %835
  %839 = vset.pattern.permute.xlu0 0
  %840 = vperm.xlu0 %839, %v718
  %v841 = vpop.permute.xlu0 %840
  %844 = vset.pattern.permute.xlu0 0
  %845 = vperm.xlu0 %844, %v719
  %v846 = vpop.permute.xlu0 %845
  %849 = vset.pattern.permute.xlu0 0
  %850 = vperm.xlu0 %849, %v720
  %v851 = vpop.permute.xlu0 %850
  %854 = vset.pattern.permute.xlu0 0
  %855 = vperm.xlu0 %854, %v721
  %v856 = vpop.permute.xlu0 %855
  %859 = vset.pattern.permute.xlu0 0
  %860 = vperm.xlu0 %859, %v722
  %v861 = vpop.permute.xlu0 %860
  %864 = vset.pattern.permute.xlu0 0
  %865 = vperm.xlu0 %864, %v723
  %v866 = vpop.permute.xlu0 %865
  %869 = vset.pattern.permute.xlu0 0
  %870 = vperm.xlu0 %869, %v724
  %v871 = vpop.permute.xlu0 %870
  %874 = vset.pattern.permute.xlu0 0
  %875 = vperm.xlu0 %874, %v725
  %v876 = vpop.permute.xlu0 %875
  %879 = vset.pattern.permute.xlu0 0
  %880 = vperm.xlu0 %879, %v726
  %v881 = vpop.permute.xlu0 %880
  %884 = vset.pattern.permute.xlu0 0
  %885 = vperm.xlu0 %884, %v727
  %v886 = vpop.permute.xlu0 %885
  %v888 = vmul.f32 %v617, %v731
  %v889 = vmul.f32 %v619, %v736
  %v890 = vmul.f32 %v622, %v741
  %v891 = vmul.f32 %v624, %v746
  %v892 = vmul.f32 %v627, %v751
  %v893 = vmul.f32 %v629, %v756
  %v894 = vmul.f32 %v632, %v761
  %v895 = vmul.f32 %v634, %v766
  %v896 = vmul.f32 %v637, %v771
  %v897 = vmul.f32 %v639, %v776
  %v898 = vmul.f32 %v642, %v781
  %v899 = vmul.f32 %v644, %v786
  %v900 = vmul.f32 %v647, %v791
  %v901 = vmul.f32 %v649, %v796
  %v902 = vmul.f32 %v652, %v801
  %v903 = vmul.f32 %v654, %v806
  %v904 = vmul.f32 %v657, %v811
  %v905 = vmul.f32 %v659, %v816
  %v906 = vmul.f32 %v662, %v821
  %v907 = vmul.f32 %v664, %v826
  %v908 = vmul.f32 %v667, %v831
  %v909 = vmul.f32 %v669, %v836
  %v910 = vmul.f32 %v672, %v841
  %v911 = vmul.f32 %v674, %v846
  %v912 = vmul.f32 %v677, %v851
  %v913 = vmul.f32 %v679, %v856
  %v914 = vmul.f32 %v682, %v861
  %v915 = vmul.f32 %v684, %v866
  %v916 = vmul.f32 %v687, %v871
  %v917 = vmul.f32 %v689, %v876
  %v918 = vmul.f32 %v692, %v881
  %v919 = vmul.f32 %v694, %v886
  %v920 = vld [vmem:[%s5] sm:$0xf]
  %v921 = vld [vmem:[%s5 + $0x4] sm:$0xf]
  %v922 = vld [vmem:[%s5 + $0x8] sm:$0xf]
  %v923 = vld [vmem:[%s5 + $0xc] sm:$0xf]
  %v924 = vld [vmem:[%s5 + $0x10] sm:$0xf]
  %v925 = vld [vmem:[%s5 + $0x14] sm:$0xf]
  %v926 = vld [vmem:[%s5 + $0x18] sm:$0xf]
  %v927 = vld [vmem:[%s5 + $0x1c] sm:$0xf]
  %v928 = vld [vmem:[%s5 + $0x20] sm:$0xf]
  %v929 = vld [vmem:[%s5 + $0x24] sm:$0xf]
  %v930 = vld [vmem:[%s5 + $0x28] sm:$0xf]
  %v931 = vld [vmem:[%s5 + $0x2c] sm:$0xf]
  %v932 = vld [vmem:[%s5 + $0x30] sm:$0xf]
  %v933 = vld [vmem:[%s5 + $0x34] sm:$0xf]
  %v934 = vld [vmem:[%s5 + $0x38] sm:$0xf]
  %v935 = vld [vmem:[%s5 + $0x3c] sm:$0xf]
  %v936 = vld [vmem:[%s5 + $0x40] sm:$0xf]
  %v937 = vld [vmem:[%s5 + $0x44] sm:$0xf]
  %v938 = vld [vmem:[%s5 + $0x48] sm:$0xf]
  %v939 = vld [vmem:[%s5 + $0x4c] sm:$0xf]
  %v940 = vld [vmem:[%s5 + $0x50] sm:$0xf]
  %v941 = vld [vmem:[%s5 + $0x54] sm:$0xf]
  %v942 = vld [vmem:[%s5 + $0x58] sm:$0xf]
  %v943 = vld [vmem:[%s5 + $0x5c] sm:$0xf]
  %v944 = vld [vmem:[%s5 + $0x60] sm:$0xf]
  %v945 = vld [vmem:[%s5 + $0x64] sm:$0xf]
  %v946 = vld [vmem:[%s5 + $0x68] sm:$0xf]
  %v947 = vld [vmem:[%s5 + $0x6c] sm:$0xf]
  %v948 = vld [vmem:[%s5 + $0x70] sm:$0xf]
  %v949 = vld [vmem:[%s5 + $0x74] sm:$0xf]
  %v950 = vld [vmem:[%s5 + $0x78] sm:$0xf]
  %v951 = vld [vmem:[%s5 + $0x7c] sm:$0xf]
  %v984 = vunpack.c.l.b16 %v920
  %v985 = vunpack.c.l.b16 %v921
  %v986 = vunpack.c.l.b16 %v922
  %v987 = vunpack.c.l.b16 %v923
  %v988 = vunpack.c.l.b16 %v924
  %v989 = vunpack.c.l.b16 %v925
  %v990 = vunpack.c.l.b16 %v926
  %v991 = vunpack.c.l.b16 %v927
  %v992 = vunpack.c.l.b16 %v928
  %v993 = vunpack.c.l.b16 %v929
  %v994 = vunpack.c.l.b16 %v930
  %v995 = vunpack.c.l.b16 %v931
  %v996 = vunpack.c.l.b16 %v932
  %v997 = vunpack.c.l.b16 %v933
  %v998 = vunpack.c.l.b16 %v934
  %v999 = vunpack.c.l.b16 %v935
  %v1000 = vunpack.c.l.b16 %v936
  %v1001 = vunpack.c.l.b16 %v937
  %v1002 = vunpack.c.l.b16 %v938
  %v1003 = vunpack.c.l.b16 %v939
  %v1004 = vunpack.c.l.b16 %v940
  %v1005 = vunpack.c.l.b16 %v941
  %v1006 = vunpack.c.l.b16 %v942
  %v1007 = vunpack.c.l.b16 %v943
  %v1008 = vunpack.c.l.b16 %v944
  %v1009 = vunpack.c.l.b16 %v945
  %v1010 = vunpack.c.l.b16 %v946
  %v1011 = vunpack.c.l.b16 %v947
  %v1012 = vunpack.c.l.b16 %v948
  %v1013 = vunpack.c.l.b16 %v949
  %v1014 = vunpack.c.l.b16 %v950
  %v1015 = vunpack.c.l.b16 %v951
  %v1016 = vpack.c.b16 %v985, %v984
  %v1017 = vpack.c.b16 %v987, %v986
  %v1018 = vpack.c.b16 %v989, %v988
  %v1019 = vpack.c.b16 %v991, %v990
  %v1020 = vpack.c.b16 %v993, %v992
  %v1021 = vpack.c.b16 %v995, %v994
  %v1022 = vpack.c.b16 %v997, %v996
  %v1023 = vpack.c.b16 %v999, %v998
  %v1024 = vpack.c.b16 %v1001, %v1000
  %v1025 = vpack.c.b16 %v1003, %v1002
  %v1026 = vpack.c.b16 %v1005, %v1004
  %v1027 = vpack.c.b16 %v1007, %v1006
  %v1028 = vpack.c.b16 %v1009, %v1008
  %v1029 = vpack.c.b16 %v1011, %v1010
  %v1030 = vpack.c.b16 %v1013, %v1012
  %v1031 = vpack.c.b16 %v1015, %v1014
  %1048 = vmatpush.bf16.msra.mxu0 %v1023
  %1049 = vmatpush.bf16.msra.mxu0 %v1022
  %1050 = vmatpush.bf16.msra.mxu0 %v1021
  %1051 = vmatpush.bf16.msra.mxu0 %v1020
  %1052 = vmatpush.bf16.msra.mxu0 %v1019
  %1053 = vmatpush.bf16.msra.mxu0 %v1018
  %1054 = vmatpush.bf16.msra.mxu0 %v1017
  %1055 = vmatpush.bf16.msra.mxu0 %v1016
  %1056 = vmatmul.bf16.gmra.mxu0 %v358
  %v1057 = vpop.f32.mrf.mxu0
  %v1058 = vadd.f32 0.0, %v1057
  %v1059 = vpop.f32.mrf.mxu0
  %v1060 = vadd.f32 0.0, %v1059
  %1061 = vmatmul.bf16.gmra.mxu0 %v360
  %v1062 = vpop.f32.mrf.mxu0
  %v1063 = vadd.f32 0.0, %v1062
  %v1064 = vpop.f32.mrf.mxu0
  %v1065 = vadd.f32 0.0, %v1064
  %1066 = vmatmul.bf16.gmra.mxu0 %v362
  %v1067 = vpop.f32.mrf.mxu0
  %v1068 = vadd.f32 0.0, %v1067
  %v1069 = vpop.f32.mrf.mxu0
  %v1070 = vadd.f32 0.0, %v1069
  %1071 = vmatmul.bf16.gmra.mxu0 %v364
  %v1072 = vpop.f32.mrf.mxu0
  %v1073 = vadd.f32 0.0, %v1072
  %v1074 = vpop.f32.mrf.mxu0
  %v1075 = vadd.f32 0.0, %v1074
  %1076 = vmatmul.bf16.gmra.mxu0 %v366
  %v1077 = vpop.f32.mrf.mxu0
  %v1078 = vadd.f32 0.0, %v1077
  %v1079 = vpop.f32.mrf.mxu0
  %v1080 = vadd.f32 0.0, %v1079
  %1081 = vmatmul.bf16.gmra.mxu0 %v368
  %v1082 = vpop.f32.mrf.mxu0
  %v1083 = vadd.f32 0.0, %v1082
  %v1084 = vpop.f32.mrf.mxu0
  %v1085 = vadd.f32 0.0, %v1084
  %1086 = vmatmul.bf16.gmra.mxu0 %v370
  %v1087 = vpop.f32.mrf.mxu0
  %v1088 = vadd.f32 0.0, %v1087
  %v1089 = vpop.f32.mrf.mxu0
  %v1090 = vadd.f32 0.0, %v1089
  %1091 = vmatmul.bf16.gmra.mxu0 %v372
  %v1092 = vpop.f32.mrf.mxu0
  %v1093 = vadd.f32 0.0, %v1092
  %v1094 = vpop.f32.mrf.mxu0
  %v1095 = vadd.f32 0.0, %v1094
  %1096 = vmatmul.bf16.gmra.mxu0 %v374
  %v1097 = vpop.f32.mrf.mxu0
  %v1098 = vadd.f32 0.0, %v1097
  %v1099 = vpop.f32.mrf.mxu0
  %v1100 = vadd.f32 0.0, %v1099
  %1101 = vmatmul.bf16.gmra.mxu0 %v376
  %v1102 = vpop.f32.mrf.mxu0
  %v1103 = vadd.f32 0.0, %v1102
  %v1104 = vpop.f32.mrf.mxu0
  %v1105 = vadd.f32 0.0, %v1104
  %1106 = vmatmul.bf16.gmra.mxu0 %v378
  %v1107 = vpop.f32.mrf.mxu0
  %v1108 = vadd.f32 0.0, %v1107
  %v1109 = vpop.f32.mrf.mxu0
  %v1110 = vadd.f32 0.0, %v1109
  %1111 = vmatmul.bf16.gmra.mxu0 %v380
  %v1112 = vpop.f32.mrf.mxu0
  %v1113 = vadd.f32 0.0, %v1112
  %v1114 = vpop.f32.mrf.mxu0
  %v1115 = vadd.f32 0.0, %v1114
  %1116 = vmatmul.bf16.gmra.mxu0 %v382
  %v1117 = vpop.f32.mrf.mxu0
  %v1118 = vadd.f32 0.0, %v1117
  %v1119 = vpop.f32.mrf.mxu0
  %v1120 = vadd.f32 0.0, %v1119
  %1121 = vmatmul.bf16.gmra.mxu0 %v384
  %v1122 = vpop.f32.mrf.mxu0
  %v1123 = vadd.f32 0.0, %v1122
  %v1124 = vpop.f32.mrf.mxu0
  %v1125 = vadd.f32 0.0, %v1124
  %1126 = vmatmul.bf16.gmra.mxu0 %v386
  %v1127 = vpop.f32.mrf.mxu0
  %v1128 = vadd.f32 0.0, %v1127
  %v1129 = vpop.f32.mrf.mxu0
  %v1130 = vadd.f32 0.0, %v1129
  %1131 = vmatmul.bf16.gmra.mxu0 %v388
  %v1132 = vpop.f32.mrf.mxu0
  %v1133 = vadd.f32 0.0, %v1132
  %v1134 = vpop.f32.mrf.mxu0
  %v1135 = vadd.f32 0.0, %v1134
  %1136 = vdwg.mxu0
  %1137 = vmatpush.bf16.msra.mxu0 %v1031
  %1138 = vmatpush.bf16.msra.mxu0 %v1030
  %1139 = vmatpush.bf16.msra.mxu0 %v1029
  %1140 = vmatpush.bf16.msra.mxu0 %v1028
  %1141 = vmatpush.bf16.msra.mxu0 %v1027
  %1142 = vmatpush.bf16.msra.mxu0 %v1026
  %1143 = vmatpush.bf16.msra.mxu0 %v1025
  %1144 = vmatpush.bf16.msra.mxu0 %v1024
  %1145 = vmatmul.bf16.gmra.mxu0 %v359
  %v1146 = vpop.f32.mrf.mxu0
  %v1147 = vadd.f32 %v1058, %v1146
  %v1148 = vpop.f32.mrf.mxu0
  %v1149 = vadd.f32 %v1060, %v1148
  %1150 = vmatmul.bf16.gmra.mxu0 %v361
  %v1151 = vpop.f32.mrf.mxu0
  %v1152 = vadd.f32 %v1063, %v1151
  %v1153 = vpop.f32.mrf.mxu0
  %v1154 = vadd.f32 %v1065, %v1153
  %1155 = vmatmul.bf16.gmra.mxu0 %v363
  %v1156 = vpop.f32.mrf.mxu0
  %v1157 = vadd.f32 %v1068, %v1156
  %v1158 = vpop.f32.mrf.mxu0
  %v1159 = vadd.f32 %v1070, %v1158
  %1160 = vmatmul.bf16.gmra.mxu0 %v365
  %v1161 = vpop.f32.mrf.mxu0
  %v1162 = vadd.f32 %v1073, %v1161
  %v1163 = vpop.f32.mrf.mxu0
  %v1164 = vadd.f32 %v1075, %v1163
  %1165 = vmatmul.bf16.gmra.mxu0 %v367
  %v1166 = vpop.f32.mrf.mxu0
  %v1167 = vadd.f32 %v1078, %v1166
  %v1168 = vpop.f32.mrf.mxu0
  %v1169 = vadd.f32 %v1080, %v1168
  %1170 = vmatmul.bf16.gmra.mxu0 %v369
  %v1171 = vpop.f32.mrf.mxu0
  %v1172 = vadd.f32 %v1083, %v1171
  %v1173 = vpop.f32.mrf.mxu0
  %v1174 = vadd.f32 %v1085, %v1173
  %1175 = vmatmul.bf16.gmra.mxu0 %v371
  %v1176 = vpop.f32.mrf.mxu0
  %v1177 = vadd.f32 %v1088, %v1176
  %v1178 = vpop.f32.mrf.mxu0
  %v1179 = vadd.f32 %v1090, %v1178
  %1180 = vmatmul.bf16.gmra.mxu0 %v373
  %v1181 = vpop.f32.mrf.mxu0
  %v1182 = vadd.f32 %v1093, %v1181
  %v1183 = vpop.f32.mrf.mxu0
  %v1184 = vadd.f32 %v1095, %v1183
  %1185 = vmatmul.bf16.gmra.mxu0 %v375
  %v1186 = vpop.f32.mrf.mxu0
  %v1187 = vadd.f32 %v1098, %v1186
  %v1188 = vpop.f32.mrf.mxu0
  %v1189 = vadd.f32 %v1100, %v1188
  %1190 = vmatmul.bf16.gmra.mxu0 %v377
  %v1191 = vpop.f32.mrf.mxu0
  %v1192 = vadd.f32 %v1103, %v1191
  %v1193 = vpop.f32.mrf.mxu0
  %v1194 = vadd.f32 %v1105, %v1193
  %1195 = vmatmul.bf16.gmra.mxu0 %v379
  %v1196 = vpop.f32.mrf.mxu0
  %v1197 = vadd.f32 %v1108, %v1196
  %v1198 = vpop.f32.mrf.mxu0
  %v1199 = vadd.f32 %v1110, %v1198
  %1200 = vmatmul.bf16.gmra.mxu0 %v381
  %v1201 = vpop.f32.mrf.mxu0
  %v1202 = vadd.f32 %v1113, %v1201
  %v1203 = vpop.f32.mrf.mxu0
  %v1204 = vadd.f32 %v1115, %v1203
  %1205 = vmatmul.bf16.gmra.mxu0 %v383
  %v1206 = vpop.f32.mrf.mxu0
  %v1207 = vadd.f32 %v1118, %v1206
  %v1208 = vpop.f32.mrf.mxu0
  %v1209 = vadd.f32 %v1120, %v1208
  %1210 = vmatmul.bf16.gmra.mxu0 %v385
  %v1211 = vpop.f32.mrf.mxu0
  %v1212 = vadd.f32 %v1123, %v1211
  %v1213 = vpop.f32.mrf.mxu0
  %v1214 = vadd.f32 %v1125, %v1213
  %1215 = vmatmul.bf16.gmra.mxu0 %v387
  %v1216 = vpop.f32.mrf.mxu0
  %v1217 = vadd.f32 %v1128, %v1216
  %v1218 = vpop.f32.mrf.mxu0
  %v1219 = vadd.f32 %v1130, %v1218
  %1220 = vmatmul.bf16.gmra.mxu0 %v389
  %v1221 = vpop.f32.mrf.mxu0
  %v1222 = vadd.f32 %v1133, %v1221
  %v1223 = vpop.f32.mrf.mxu0
  %v1224 = vadd.f32 %v1135, %v1223
  %1225 = vdwg.mxu0
  %v1226 = vld [vmem:[%s3] sm:$0xff]
  %v1227 = vld [vmem:[%s3 + $0x8] sm:$0xff]
  %v1228 = vld [vmem:[%s3 + $0x10] sm:$0xff]
  %v1229 = vld [vmem:[%s3 + $0x18] sm:$0xff]
  %v1230 = vld [vmem:[%s3 + $0x20] sm:$0xff]
  %v1231 = vld [vmem:[%s3 + $0x28] sm:$0xff]
  %v1232 = vld [vmem:[%s3 + $0x30] sm:$0xff]
  %v1233 = vld [vmem:[%s3 + $0x38] sm:$0xff]
  %v1234 = vld [vmem:[%s3 + $0x40] sm:$0xff]
  %v1235 = vld [vmem:[%s3 + $0x48] sm:$0xff]
  %v1236 = vld [vmem:[%s3 + $0x50] sm:$0xff]
  %v1237 = vld [vmem:[%s3 + $0x58] sm:$0xff]
  %v1238 = vld [vmem:[%s3 + $0x60] sm:$0xff]
  %v1239 = vld [vmem:[%s3 + $0x68] sm:$0xff]
  %v1240 = vld [vmem:[%s3 + $0x70] sm:$0xff]
  %v1241 = vld [vmem:[%s3 + $0x78] sm:$0xff]
  %v1242 = vld [vmem:[%s3 + $0x80] sm:$0xff]
  %v1243 = vld [vmem:[%s3 + $0x88] sm:$0xff]
  %v1244 = vld [vmem:[%s3 + $0x90] sm:$0xff]
  %v1245 = vld [vmem:[%s3 + $0x98] sm:$0xff]
  %v1246 = vld [vmem:[%s3 + $0xa0] sm:$0xff]
  %v1247 = vld [vmem:[%s3 + $0xa8] sm:$0xff]
  %v1248 = vld [vmem:[%s3 + $0xb0] sm:$0xff]
  %v1249 = vld [vmem:[%s3 + $0xb8] sm:$0xff]
  %v1250 = vld [vmem:[%s3 + $0xc0] sm:$0xff]
  %v1251 = vld [vmem:[%s3 + $0xc8] sm:$0xff]
  %v1252 = vld [vmem:[%s3 + $0xd0] sm:$0xff]
  %v1253 = vld [vmem:[%s3 + $0xd8] sm:$0xff]
  %v1254 = vld [vmem:[%s3 + $0xe0] sm:$0xff]
  %v1255 = vld [vmem:[%s3 + $0xe8] sm:$0xff]
  %v1256 = vld [vmem:[%s3 + $0xf0] sm:$0xff]
  %v1257 = vld [vmem:[%s3 + $0xf8] sm:$0xff]
  %1259 = vset.pattern.permute.xlu0 0
  %1260 = vperm.xlu0 %1259, %v1226
  %v1261 = vpop.permute.xlu0 %1260
  %1264 = vset.pattern.permute.xlu0 0
  %1265 = vperm.xlu0 %1264, %v1227
  %v1266 = vpop.permute.xlu0 %1265
  %1269 = vset.pattern.permute.xlu0 0
  %1270 = vperm.xlu0 %1269, %v1228
  %v1271 = vpop.permute.xlu0 %1270
  %1274 = vset.pattern.permute.xlu0 0
  %1275 = vperm.xlu0 %1274, %v1229
  %v1276 = vpop.permute.xlu0 %1275
  %1279 = vset.pattern.permute.xlu0 0
  %1280 = vperm.xlu0 %1279, %v1230
  %v1281 = vpop.permute.xlu0 %1280
  %1284 = vset.pattern.permute.xlu0 0
  %1285 = vperm.xlu0 %1284, %v1231
  %v1286 = vpop.permute.xlu0 %1285
  %1289 = vset.pattern.permute.xlu0 0
  %1290 = vperm.xlu0 %1289, %v1232
  %v1291 = vpop.permute.xlu0 %1290
  %1294 = vset.pattern.permute.xlu0 0
  %1295 = vperm.xlu0 %1294, %v1233
  %v1296 = vpop.permute.xlu0 %1295
  %1299 = vset.pattern.permute.xlu0 0
  %1300 = vperm.xlu0 %1299, %v1234
  %v1301 = vpop.permute.xlu0 %1300
  %1304 = vset.pattern.permute.xlu0 0
  %1305 = vperm.xlu0 %1304, %v1235
  %v1306 = vpop.permute.xlu0 %1305
  %1309 = vset.pattern.permute.xlu0 0
  %1310 = vperm.xlu0 %1309, %v1236
  %v1311 = vpop.permute.xlu0 %1310
  %1314 = vset.pattern.permute.xlu0 0
  %1315 = vperm.xlu0 %1314, %v1237
  %v1316 = vpop.permute.xlu0 %1315
  %1319 = vset.pattern.permute.xlu0 0
  %1320 = vperm.xlu0 %1319, %v1238
  %v1321 = vpop.permute.xlu0 %1320
  %1324 = vset.pattern.permute.xlu0 0
  %1325 = vperm.xlu0 %1324, %v1239
  %v1326 = vpop.permute.xlu0 %1325
  %1329 = vset.pattern.permute.xlu0 0
  %1330 = vperm.xlu0 %1329, %v1240
  %v1331 = vpop.permute.xlu0 %1330
  %1334 = vset.pattern.permute.xlu0 0
  %1335 = vperm.xlu0 %1334, %v1241
  %v1336 = vpop.permute.xlu0 %1335
  %1339 = vset.pattern.permute.xlu0 0
  %1340 = vperm.xlu0 %1339, %v1242
  %v1341 = vpop.permute.xlu0 %1340
  %1344 = vset.pattern.permute.xlu0 0
  %1345 = vperm.xlu0 %1344, %v1243
  %v1346 = vpop.permute.xlu0 %1345
  %1349 = vset.pattern.permute.xlu0 0
  %1350 = vperm.xlu0 %1349, %v1244
  %v1351 = vpop.permute.xlu0 %1350
  %1354 = vset.pattern.permute.xlu0 0
  %1355 = vperm.xlu0 %1354, %v1245
  %v1356 = vpop.permute.xlu0 %1355
  %1359 = vset.pattern.permute.xlu0 0
  %1360 = vperm.xlu0 %1359, %v1246
  %v1361 = vpop.permute.xlu0 %1360
  %1364 = vset.pattern.permute.xlu0 0
  %1365 = vperm.xlu0 %1364, %v1247
  %v1366 = vpop.permute.xlu0 %1365
  %1369 = vset.pattern.permute.xlu0 0
  %1370 = vperm.xlu0 %1369, %v1248
  %v1371 = vpop.permute.xlu0 %1370
  %1374 = vset.pattern.permute.xlu0 0
  %1375 = vperm.xlu0 %1374, %v1249
  %v1376 = vpop.permute.xlu0 %1375
  %1379 = vset.pattern.permute.xlu0 0
  %1380 = vperm.xlu0 %1379, %v1250
  %v1381 = vpop.permute.xlu0 %1380
  %1384 = vset.pattern.permute.xlu0 0
  %1385 = vperm.xlu0 %1384, %v1251
  %v1386 = vpop.permute.xlu0 %1385
  %1389 = vset.pattern.permute.xlu0 0
  %1390 = vperm.xlu0 %1389, %v1252
  %v1391 = vpop.permute.xlu0 %1390
  %1394 = vset.pattern.permute.xlu0 0
  %1395 = vperm.xlu0 %1394, %v1253
  %v1396 = vpop.permute.xlu0 %1395
  %1399 = vset.pattern.permute.xlu0 0
  %1400 = vperm.xlu0 %1399, %v1254
  %v1401 = vpop.permute.xlu0 %1400
  %1404 = vset.pattern.permute.xlu0 0
  %1405 = vperm.xlu0 %1404, %v1255
  %v1406 = vpop.permute.xlu0 %1405
  %1409 = vset.pattern.permute.xlu0 0
  %1410 = vperm.xlu0 %1409, %v1256
  %v1411 = vpop.permute.xlu0 %1410
  %1414 = vset.pattern.permute.xlu0 0
  %1415 = vperm.xlu0 %1414, %v1257
  %v1416 = vpop.permute.xlu0 %1415
  %v1418 = vmul.f32 %v1147, %v1261
  %v1419 = vmul.f32 %v1149, %v1266
  %v1420 = vmul.f32 %v1152, %v1271
  %v1421 = vmul.f32 %v1154, %v1276
  %v1422 = vmul.f32 %v1157, %v1281
  %v1423 = vmul.f32 %v1159, %v1286
  %v1424 = vmul.f32 %v1162, %v1291
  %v1425 = vmul.f32 %v1164, %v1296
  %v1426 = vmul.f32 %v1167, %v1301
  %v1427 = vmul.f32 %v1169, %v1306
  %v1428 = vmul.f32 %v1172, %v1311
  %v1429 = vmul.f32 %v1174, %v1316
  %v1430 = vmul.f32 %v1177, %v1321
  %v1431 = vmul.f32 %v1179, %v1326
  %v1432 = vmul.f32 %v1182, %v1331
  %v1433 = vmul.f32 %v1184, %v1336
  %v1434 = vmul.f32 %v1187, %v1341
  %v1435 = vmul.f32 %v1189, %v1346
  %v1436 = vmul.f32 %v1192, %v1351
  %v1437 = vmul.f32 %v1194, %v1356
  %v1438 = vmul.f32 %v1197, %v1361
  %v1439 = vmul.f32 %v1199, %v1366
  %v1440 = vmul.f32 %v1202, %v1371
  %v1441 = vmul.f32 %v1204, %v1376
  %v1442 = vmul.f32 %v1207, %v1381
  %v1443 = vmul.f32 %v1209, %v1386
  %v1444 = vmul.f32 %v1212, %v1391
  %v1445 = vmul.f32 %v1214, %v1396
  %v1446 = vmul.f32 %v1217, %v1401
  %v1447 = vmul.f32 %v1219, %v1406
  %v1448 = vmul.f32 %v1222, %v1411
  %v1449 = vmul.f32 %v1224, %v1416
  %v1450 = vld [vmem:[%s6] sm:$0x1]
  %v1451 = vld [vmem:[%s7] sm:$0xff]
  %v1452 = vld [vmem:[%s7 + $0x8] sm:$0xff]
  %v1453 = vld [vmem:[%s7 + $0x10] sm:$0xff]
  %v1454 = vld [vmem:[%s7 + $0x18] sm:$0xff]
  %v1455 = vld [vmem:[%s7 + $0x20] sm:$0xff]
  %v1456 = vld [vmem:[%s7 + $0x28] sm:$0xff]
  %v1457 = vld [vmem:[%s7 + $0x30] sm:$0xff]
  %v1458 = vld [vmem:[%s7 + $0x38] sm:$0xff]
  %v1459 = vld [vmem:[%s8] sm:$0x1]
  %1492 = vrot.lane.b32.xlu0 %v1418, 32
  %v1493 = vpop.permute.xlu0 %1492
  %1494 = vrot.lane.b32.xlu0 %v1419, 32
  %v1495 = vpop.permute.xlu0 %1494
  %1496 = vrot.lane.b32.xlu0 %v1420, 32
  %v1497 = vpop.permute.xlu0 %1496
  %1498 = vrot.lane.b32.xlu0 %v1421, 32
  %v1499 = vpop.permute.xlu0 %1498
  %1500 = vrot.lane.b32.xlu0 %v1422, 32
  %v1501 = vpop.permute.xlu0 %1500
  %1502 = vrot.lane.b32.xlu0 %v1423, 32
  %v1503 = vpop.permute.xlu0 %1502
  %1504 = vrot.lane.b32.xlu0 %v1424, 32
  %v1505 = vpop.permute.xlu0 %1504
  %1506 = vrot.lane.b32.xlu0 %v1425, 32
  %v1507 = vpop.permute.xlu0 %1506
  %1508 = vrot.lane.b32.xlu0 %v1426, 32
  %v1509 = vpop.permute.xlu0 %1508
  %1510 = vrot.lane.b32.xlu0 %v1427, 32
  %v1511 = vpop.permute.xlu0 %1510
  %1512 = vrot.lane.b32.xlu0 %v1428, 32
  %v1513 = vpop.permute.xlu0 %1512
  %1514 = vrot.lane.b32.xlu0 %v1429, 32
  %v1515 = vpop.permute.xlu0 %1514
  %1516 = vrot.lane.b32.xlu0 %v1430, 32
  %v1517 = vpop.permute.xlu0 %1516
  %1518 = vrot.lane.b32.xlu0 %v1431, 32
  %v1519 = vpop.permute.xlu0 %1518
  %1520 = vrot.lane.b32.xlu0 %v1432, 32
  %v1521 = vpop.permute.xlu0 %1520
  %1522 = vrot.lane.b32.xlu0 %v1433, 32
  %v1523 = vpop.permute.xlu0 %1522
  %1524 = vrot.lane.b32.xlu0 %v1434, 32
  %v1525 = vpop.permute.xlu0 %1524
  %1526 = vrot.lane.b32.xlu0 %v1435, 32
  %v1527 = vpop.permute.xlu0 %1526
  %1528 = vrot.lane.b32.xlu0 %v1436, 32
  %v1529 = vpop.permute.xlu0 %1528
  %1530 = vrot.lane.b32.xlu0 %v1437, 32
  %v1531 = vpop.permute.xlu0 %1530
  %1532 = vrot.lane.b32.xlu0 %v1438, 32
  %v1533 = vpop.permute.xlu0 %1532
  %1534 = vrot.lane.b32.xlu0 %v1439, 32
  %v1535 = vpop.permute.xlu0 %1534
  %1536 = vrot.lane.b32.xlu0 %v1440, 32
  %v1537 = vpop.permute.xlu0 %1536
  %1538 = vrot.lane.b32.xlu0 %v1441, 32
  %v1539 = vpop.permute.xlu0 %1538
  %1540 = vrot.lane.b32.xlu0 %v1442, 32
  %v1541 = vpop.permute.xlu0 %1540
  %1542 = vrot.lane.b32.xlu0 %v1443, 32
  %v1543 = vpop.permute.xlu0 %1542
  %1544 = vrot.lane.b32.xlu0 %v1444, 32
  %v1545 = vpop.permute.xlu0 %1544
  %1546 = vrot.lane.b32.xlu0 %v1445, 32
  %v1547 = vpop.permute.xlu0 %1546
  %1548 = vrot.lane.b32.xlu0 %v1446, 32
  %v1549 = vpop.permute.xlu0 %1548
  %1550 = vrot.lane.b32.xlu0 %v1447, 32
  %v1551 = vpop.permute.xlu0 %1550
  %1552 = vrot.lane.b32.xlu0 %v1448, 32
  %v1553 = vpop.permute.xlu0 %1552
  %1554 = vrot.lane.b32.xlu0 %v1449, 32
  %v1555 = vpop.permute.xlu0 %1554
  %vm1588 = vcmask 261120
  %v1589 = vsel %vm1588, %v888, %v1493
  %v1590 = vsel %vm1588, %v889, %v1495
  %v1591 = vsel %vm1588, %v890, %v1497
  %v1592 = vsel %vm1588, %v891, %v1499
  %v1593 = vsel %vm1588, %v892, %v1501
  %v1594 = vsel %vm1588, %v893, %v1503
  %v1595 = vsel %vm1588, %v894, %v1505
  %v1596 = vsel %vm1588, %v895, %v1507
  %v1597 = vsel %vm1588, %v896, %v1509
  %v1598 = vsel %vm1588, %v897, %v1511
  %v1599 = vsel %vm1588, %v898, %v1513
  %v1600 = vsel %vm1588, %v899, %v1515
  %v1601 = vsel %vm1588, %v900, %v1517
  %v1602 = vsel %vm1588, %v901, %v1519
  %v1603 = vsel %vm1588, %v902, %v1521
  %v1604 = vsel %vm1588, %v903, %v1523
  %v1605 = vsel %vm1588, %v904, %v1525
  %v1606 = vsel %vm1588, %v905, %v1527
  %v1607 = vsel %vm1588, %v906, %v1529
  %v1608 = vsel %vm1588, %v907, %v1531
  %v1609 = vsel %vm1588, %v908, %v1533
  %v1610 = vsel %vm1588, %v909, %v1535
  %v1611 = vsel %vm1588, %v910, %v1537
  %v1612 = vsel %vm1588, %v911, %v1539
  %v1613 = vsel %vm1588, %v912, %v1541
  %v1614 = vsel %vm1588, %v913, %v1543
  %v1615 = vsel %vm1588, %v914, %v1545
  %v1616 = vsel %vm1588, %v915, %v1547
  %v1617 = vsel %vm1588, %v916, %v1549
  %v1618 = vsel %vm1588, %v917, %v1551
  %v1619 = vsel %vm1588, %v918, %v1553
  %v1620 = vsel %vm1588, %v919, %v1555
  %v1622 = vperm.slane %v1450, 0
  %v1624 = vadd.f32 %v1589, %v1622
  %v1625 = vadd.f32 %v1590, %v1622
  %v1626 = vadd.f32 %v1591, %v1622
  %v1627 = vadd.f32 %v1592, %v1622
  %v1628 = vadd.f32 %v1593, %v1622
  %v1629 = vadd.f32 %v1594, %v1622
  %v1630 = vadd.f32 %v1595, %v1622
  %v1631 = vadd.f32 %v1596, %v1622
  %v1632 = vadd.f32 %v1597, %v1622
  %v1633 = vadd.f32 %v1598, %v1622
  %v1634 = vadd.f32 %v1599, %v1622
  %v1635 = vadd.f32 %v1600, %v1622
  %v1636 = vadd.f32 %v1601, %v1622
  %v1637 = vadd.f32 %v1602, %v1622
  %v1638 = vadd.f32 %v1603, %v1622
  %v1639 = vadd.f32 %v1604, %v1622
  %v1640 = vadd.f32 %v1605, %v1622
  %v1641 = vadd.f32 %v1606, %v1622
  %v1642 = vadd.f32 %v1607, %v1622
  %v1643 = vadd.f32 %v1608, %v1622
  %v1644 = vadd.f32 %v1609, %v1622
  %v1645 = vadd.f32 %v1610, %v1622
  %v1646 = vadd.f32 %v1611, %v1622
  %v1647 = vadd.f32 %v1612, %v1622
  %v1648 = vadd.f32 %v1613, %v1622
  %v1649 = vadd.f32 %v1614, %v1622
  %v1650 = vadd.f32 %v1615, %v1622
  %v1651 = vadd.f32 %v1616, %v1622
  %v1652 = vadd.f32 %v1617, %v1622
  %v1653 = vadd.f32 %v1618, %v1622
  %v1654 = vadd.f32 %v1619, %v1622
  %v1655 = vadd.f32 %v1620, %v1622
  %v1656 = vmax.f32 %v1624, 0.0
  %v1657 = vmax.f32 %v1625, 0.0
  %v1658 = vmax.f32 %v1626, 0.0
  %v1659 = vmax.f32 %v1627, 0.0
  %v1660 = vmax.f32 %v1628, 0.0
  %v1661 = vmax.f32 %v1629, 0.0
  %v1662 = vmax.f32 %v1630, 0.0
  %v1663 = vmax.f32 %v1631, 0.0
  %v1664 = vmax.f32 %v1632, 0.0
  %v1665 = vmax.f32 %v1633, 0.0
  %v1666 = vmax.f32 %v1634, 0.0
  %v1667 = vmax.f32 %v1635, 0.0
  %v1668 = vmax.f32 %v1636, 0.0
  %v1669 = vmax.f32 %v1637, 0.0
  %v1670 = vmax.f32 %v1638, 0.0
  %v1671 = vmax.f32 %v1639, 0.0
  %v1672 = vmax.f32 %v1640, 0.0
  %v1673 = vmax.f32 %v1641, 0.0
  %v1674 = vmax.f32 %v1642, 0.0
  %v1675 = vmax.f32 %v1643, 0.0
  %v1676 = vmax.f32 %v1644, 0.0
  %v1677 = vmax.f32 %v1645, 0.0
  %v1678 = vmax.f32 %v1646, 0.0
  %v1679 = vmax.f32 %v1647, 0.0
  %v1680 = vmax.f32 %v1648, 0.0
  %v1681 = vmax.f32 %v1649, 0.0
  %v1682 = vmax.f32 %v1650, 0.0
  %v1683 = vmax.f32 %v1651, 0.0
  %v1684 = vmax.f32 %v1652, 0.0
  %v1685 = vmax.f32 %v1653, 0.0
  %v1686 = vmax.f32 %v1654, 0.0
  %v1687 = vmax.f32 %v1655, 0.0
  %v1689 = vperm.slane %v1459, 0
  %vm1691 = vcmask 523264
  %v1693 = vsel %vm1691, %v1656, 0
  %v1696 = vsel %vm1691, %v1657, 0
  %v1699 = vsel %vm1691, %v1658, 0
  %v1702 = vsel %vm1691, %v1659, 0
  %v1705 = vsel %vm1691, %v1660, 0
  %v1708 = vsel %vm1691, %v1661, 0
  %v1711 = vsel %vm1691, %v1662, 0
  %v1714 = vsel %vm1691, %v1663, 0
  %v1717 = vsel %vm1691, %v1664, 0
  %v1720 = vsel %vm1691, %v1665, 0
  %v1723 = vsel %vm1691, %v1666, 0
  %v1726 = vsel %vm1691, %v1667, 0
  %v1729 = vsel %vm1691, %v1668, 0
  %v1732 = vsel %vm1691, %v1669, 0
  %v1735 = vsel %vm1691, %v1670, 0
  %v1738 = vsel %vm1691, %v1671, 0
  %v1741 = vsel %vm1691, %v1672, 0
  %v1744 = vsel %vm1691, %v1673, 0
  %v1747 = vsel %vm1691, %v1674, 0
  %v1750 = vsel %vm1691, %v1675, 0
  %v1753 = vsel %vm1691, %v1676, 0
  %v1756 = vsel %vm1691, %v1677, 0
  %v1759 = vsel %vm1691, %v1678, 0
  %v1762 = vsel %vm1691, %v1679, 0
  %v1765 = vsel %vm1691, %v1680, 0
  %v1768 = vsel %vm1691, %v1681, 0
  %v1771 = vsel %vm1691, %v1682, 0
  %v1774 = vsel %vm1691, %v1683, 0
  %v1777 = vsel %vm1691, %v1684, 0
  %v1780 = vsel %vm1691, %v1685, 0
  %v1783 = vsel %vm1691, %v1686, 0
  %v1786 = vsel %vm1691, %v1687, 0
  %1788 = vmatpush.msra.mxu0 0.0
  %1789 = vmatpush.msra.mxu0 0.0
  %1790 = vmatpush.msra.mxu0 0.0
  %1791 = vmatpush.msra.mxu0 0.0
  %1792 = vmatpush.msra.mxu0 0.0
  %1793 = vmatpush.msra.mxu0 0.0
  %1794 = vmatpush.msra.mxu0 0.0
  %1795 = vmatpush.msra.mxu0 0.0
  %1796 = vmatpush.msra.mxu0 %v1458
  %1797 = vmatpush.msra.mxu0 %v1457
  %1798 = vmatpush.msra.mxu0 %v1456
  %1799 = vmatpush.msra.mxu0 %v1455
  %1800 = vmatpush.msra.mxu0 %v1454
  %1801 = vmatpush.msra.mxu0 %v1453
  %1802 = vmatpush.msra.mxu0 %v1452
  %1803 = vmatpush.msra.mxu0 %v1451
  %1804 = vmatmul.f32.gmra.mxu0 %v1693
  %v1805 = vpop.f32.mrf.mxu0
  %v1806 = vadd.f32 %v1689, %v1805
  %1807 = vmatmul.f32.gmra.mxu0 %v1696
  %v1808 = vpop.f32.mrf.mxu0
  %v1809 = vadd.f32 %v1689, %v1808
  %1810 = vmatmul.f32.gmra.mxu0 %v1699
  %v1811 = vpop.f32.mrf.mxu0
  %v1812 = vadd.f32 %v1689, %v1811
  %1813 = vmatmul.f32.gmra.mxu0 %v1702
  %v1814 = vpop.f32.mrf.mxu0
  %v1815 = vadd.f32 %v1689, %v1814
  %1816 = vmatmul.f32.gmra.mxu0 %v1705
  %v1817 = vpop.f32.mrf.mxu0
  %v1818 = vadd.f32 %v1689, %v1817
  %1819 = vmatmul.f32.gmra.mxu0 %v1708
  %v1820 = vpop.f32.mrf.mxu0
  %v1821 = vadd.f32 %v1689, %v1820
  %1822 = vmatmul.f32.gmra.mxu0 %v1711
  %v1823 = vpop.f32.mrf.mxu0
  %v1824 = vadd.f32 %v1689, %v1823
  %1825 = vmatmul.f32.gmra.mxu0 %v1714
  %v1826 = vpop.f32.mrf.mxu0
  %v1827 = vadd.f32 %v1689, %v1826
  %1828 = vmatmul.f32.gmra.mxu0 %v1717
  %v1829 = vpop.f32.mrf.mxu0
  %v1830 = vadd.f32 %v1689, %v1829
  %1831 = vmatmul.f32.gmra.mxu0 %v1720
  %v1832 = vpop.f32.mrf.mxu0
  %v1833 = vadd.f32 %v1689, %v1832
  %1834 = vmatmul.f32.gmra.mxu0 %v1723
  %v1835 = vpop.f32.mrf.mxu0
  %v1836 = vadd.f32 %v1689, %v1835
  %1837 = vmatmul.f32.gmra.mxu0 %v1726
  %v1838 = vpop.f32.mrf.mxu0
  %v1839 = vadd.f32 %v1689, %v1838
  %1840 = vmatmul.f32.gmra.mxu0 %v1729
  %v1841 = vpop.f32.mrf.mxu0
  %v1842 = vadd.f32 %v1689, %v1841
  %1843 = vmatmul.f32.gmra.mxu0 %v1732
  %v1844 = vpop.f32.mrf.mxu0
  %v1845 = vadd.f32 %v1689, %v1844
  %1846 = vmatmul.f32.gmra.mxu0 %v1735
  %v1847 = vpop.f32.mrf.mxu0
  %v1848 = vadd.f32 %v1689, %v1847
  %1849 = vmatmul.f32.gmra.mxu0 %v1738
  %v1850 = vpop.f32.mrf.mxu0
  %v1851 = vadd.f32 %v1689, %v1850
  %1852 = vmatmul.f32.gmra.mxu0 %v1741
  %v1853 = vpop.f32.mrf.mxu0
  %v1854 = vadd.f32 %v1689, %v1853
  %1855 = vmatmul.f32.gmra.mxu0 %v1744
  %v1856 = vpop.f32.mrf.mxu0
  %v1857 = vadd.f32 %v1689, %v1856
  %1858 = vmatmul.f32.gmra.mxu0 %v1747
  %v1859 = vpop.f32.mrf.mxu0
  %v1860 = vadd.f32 %v1689, %v1859
  %1861 = vmatmul.f32.gmra.mxu0 %v1750
  %v1862 = vpop.f32.mrf.mxu0
  %v1863 = vadd.f32 %v1689, %v1862
  %1864 = vmatmul.f32.gmra.mxu0 %v1753
  %v1865 = vpop.f32.mrf.mxu0
  %v1866 = vadd.f32 %v1689, %v1865
  %1867 = vmatmul.f32.gmra.mxu0 %v1756
  %v1868 = vpop.f32.mrf.mxu0
  %v1869 = vadd.f32 %v1689, %v1868
  %1870 = vmatmul.f32.gmra.mxu0 %v1759
  %v1871 = vpop.f32.mrf.mxu0
  %v1872 = vadd.f32 %v1689, %v1871
  %1873 = vmatmul.f32.gmra.mxu0 %v1762
  %v1874 = vpop.f32.mrf.mxu0
  %v1875 = vadd.f32 %v1689, %v1874
  %1876 = vmatmul.f32.gmra.mxu0 %v1765
  %v1877 = vpop.f32.mrf.mxu0
  %v1878 = vadd.f32 %v1689, %v1877
  %1879 = vmatmul.f32.gmra.mxu0 %v1768
  %v1880 = vpop.f32.mrf.mxu0
  %v1881 = vadd.f32 %v1689, %v1880
  %1882 = vmatmul.f32.gmra.mxu0 %v1771
  %v1883 = vpop.f32.mrf.mxu0
  %v1884 = vadd.f32 %v1689, %v1883
  %1885 = vmatmul.f32.gmra.mxu0 %v1774
  %v1886 = vpop.f32.mrf.mxu0
  %v1887 = vadd.f32 %v1689, %v1886
  %1888 = vmatmul.f32.gmra.mxu0 %v1777
  %v1889 = vpop.f32.mrf.mxu0
  %v1890 = vadd.f32 %v1689, %v1889
  %1891 = vmatmul.f32.gmra.mxu0 %v1780
  %v1892 = vpop.f32.mrf.mxu0
  %v1893 = vadd.f32 %v1689, %v1892
  %1894 = vmatmul.f32.gmra.mxu0 %v1783
  %v1895 = vpop.f32.mrf.mxu0
  %v1896 = vadd.f32 %v1689, %v1895
  %1897 = vmatmul.f32.gmra.mxu0 %v1786
  %v1898 = vpop.f32.mrf.mxu0
  %v1899 = vadd.f32 %v1689, %v1898
  %1900 = vdwg.mxu0
  %v1901 = vmax.f32 %v1806, 0.0
  %v1902 = vmax.f32 %v1809, 0.0
  %v1903 = vmax.f32 %v1812, 0.0
  %v1904 = vmax.f32 %v1815, 0.0
  %v1905 = vmax.f32 %v1818, 0.0
  %v1906 = vmax.f32 %v1821, 0.0
  %v1907 = vmax.f32 %v1824, 0.0
  %v1908 = vmax.f32 %v1827, 0.0
  %v1909 = vmax.f32 %v1830, 0.0
  %v1910 = vmax.f32 %v1833, 0.0
  %v1911 = vmax.f32 %v1836, 0.0
  %v1912 = vmax.f32 %v1839, 0.0
  %v1913 = vmax.f32 %v1842, 0.0
  %v1914 = vmax.f32 %v1845, 0.0
  %v1915 = vmax.f32 %v1848, 0.0
  %v1916 = vmax.f32 %v1851, 0.0
  %v1917 = vmax.f32 %v1854, 0.0
  %v1918 = vmax.f32 %v1857, 0.0
  %v1919 = vmax.f32 %v1860, 0.0
  %v1920 = vmax.f32 %v1863, 0.0
  %v1921 = vmax.f32 %v1866, 0.0
  %v1922 = vmax.f32 %v1869, 0.0
  %v1923 = vmax.f32 %v1872, 0.0
  %v1924 = vmax.f32 %v1875, 0.0
  %v1925 = vmax.f32 %v1878, 0.0
  %v1926 = vmax.f32 %v1881, 0.0
  %v1927 = vmax.f32 %v1884, 0.0
  %v1928 = vmax.f32 %v1887, 0.0
  %v1929 = vmax.f32 %v1890, 0.0
  %v1930 = vmax.f32 %v1893, 0.0
  %v1931 = vmax.f32 %v1896, 0.0
  %v1932 = vmax.f32 %v1899, 0.0
  %v1933 = vpack.c.bf16 %v1902, %v1901
  %v1934 = vpack.c.bf16 %v1904, %v1903
  %v1935 = vpack.c.bf16 %v1906, %v1905
  %v1936 = vpack.c.bf16 %v1908, %v1907
  %v1937 = vpack.c.bf16 %v1910, %v1909
  %v1938 = vpack.c.bf16 %v1912, %v1911
  %v1939 = vpack.c.bf16 %v1914, %v1913
  %v1940 = vpack.c.bf16 %v1916, %v1915
  %v1941 = vpack.c.bf16 %v1918, %v1917
  %v1942 = vpack.c.bf16 %v1920, %v1919
  %v1943 = vpack.c.bf16 %v1922, %v1921
  %v1944 = vpack.c.bf16 %v1924, %v1923
  %v1945 = vpack.c.bf16 %v1926, %v1925
  %v1946 = vpack.c.bf16 %v1928, %v1927
  %v1947 = vpack.c.bf16 %v1930, %v1929
  %v1948 = vpack.c.bf16 %v1932, %v1931
  %1949 = vmatpush.bf16.msra.mxu0 %v1940
  %1950 = vmatpush.bf16.msra.mxu0 %v1939
  %1951 = vmatpush.bf16.msra.mxu0 %v1938
  %1952 = vmatpush.bf16.msra.mxu0 %v1937
  %1953 = vmatpush.bf16.msra.mxu0 %v1936
  %1954 = vmatpush.bf16.msra.mxu0 %v1935
  %1955 = vmatpush.bf16.msra.mxu0 %v1934
  %1956 = vmatpush.bf16.msra.mxu0 %v1933
  %1957 = vmatmul.bf16.gmra.mxu0 %v182
  %v1958 = vpop.f32.mrf.mxu0
  %v1959 = vadd.f32 0.0, %v1958
  %v1960 = vpop.f32.mrf.mxu0
  %v1961 = vadd.f32 0.0, %v1960
  %1962 = vmatmul.bf16.gmra.mxu0 %v184
  %v1963 = vpop.f32.mrf.mxu0
  %v1964 = vadd.f32 0.0, %v1963
  %v1965 = vpop.f32.mrf.mxu0
  %v1966 = vadd.f32 0.0, %v1965
  %1967 = vmatmul.bf16.gmra.mxu0 %v186
  %v1968 = vpop.f32.mrf.mxu0
  %v1969 = vadd.f32 0.0, %v1968
  %v1970 = vpop.f32.mrf.mxu0
  %v1971 = vadd.f32 0.0, %v1970
  %1972 = vmatmul.bf16.gmra.mxu0 %v188
  %v1973 = vpop.f32.mrf.mxu0
  %v1974 = vadd.f32 0.0, %v1973
  %v1975 = vpop.f32.mrf.mxu0
  %v1976 = vadd.f32 0.0, %v1975
  %1977 = vmatmul.bf16.gmra.mxu0 %v190
  %v1978 = vpop.f32.mrf.mxu0
  %v1979 = vadd.f32 0.0, %v1978
  %v1980 = vpop.f32.mrf.mxu0
  %v1981 = vadd.f32 0.0, %v1980
  %1982 = vmatmul.bf16.gmra.mxu0 %v192
  %v1983 = vpop.f32.mrf.mxu0
  %v1984 = vadd.f32 0.0, %v1983
  %v1985 = vpop.f32.mrf.mxu0
  %v1986 = vadd.f32 0.0, %v1985
  %1987 = vmatmul.bf16.gmra.mxu0 %v194
  %v1988 = vpop.f32.mrf.mxu0
  %v1989 = vadd.f32 0.0, %v1988
  %v1990 = vpop.f32.mrf.mxu0
  %v1991 = vadd.f32 0.0, %v1990
  %1992 = vmatmul.bf16.gmra.mxu0 %v196
  %v1993 = vpop.f32.mrf.mxu0
  %v1994 = vadd.f32 0.0, %v1993
  %v1995 = vpop.f32.mrf.mxu0
  %v1996 = vadd.f32 0.0, %v1995
  %1997 = vmatmul.bf16.gmra.mxu0 %v198
  %v1998 = vpop.f32.mrf.mxu0
  %v1999 = vadd.f32 0.0, %v1998
  %v2000 = vpop.f32.mrf.mxu0
  %v2001 = vadd.f32 0.0, %v2000
  %2002 = vmatmul.bf16.gmra.mxu0 %v200
  %v2003 = vpop.f32.mrf.mxu0
  %v2004 = vadd.f32 0.0, %v2003
  %v2005 = vpop.f32.mrf.mxu0
  %v2006 = vadd.f32 0.0, %v2005
  %2007 = vmatmul.bf16.gmra.mxu0 %v202
  %v2008 = vpop.f32.mrf.mxu0
  %v2009 = vadd.f32 0.0, %v2008
  %v2010 = vpop.f32.mrf.mxu0
  %v2011 = vadd.f32 0.0, %v2010
  %2012 = vmatmul.bf16.gmra.mxu0 %v204
  %v2013 = vpop.f32.mrf.mxu0
  %v2014 = vadd.f32 0.0, %v2013
  %v2015 = vpop.f32.mrf.mxu0
  %v2016 = vadd.f32 0.0, %v2015
  %2017 = vmatmul.bf16.gmra.mxu0 %v206
  %v2018 = vpop.f32.mrf.mxu0
  %v2019 = vadd.f32 0.0, %v2018
  %v2020 = vpop.f32.mrf.mxu0
  %v2021 = vadd.f32 0.0, %v2020
  %2022 = vmatmul.bf16.gmra.mxu0 %v208
  %v2023 = vpop.f32.mrf.mxu0
  %v2024 = vadd.f32 0.0, %v2023
  %v2025 = vpop.f32.mrf.mxu0
  %v2026 = vadd.f32 0.0, %v2025
  %2027 = vmatmul.bf16.gmra.mxu0 %v210
  %v2028 = vpop.f32.mrf.mxu0
  %v2029 = vadd.f32 0.0, %v2028
  %v2030 = vpop.f32.mrf.mxu0
  %v2031 = vadd.f32 0.0, %v2030
  %2032 = vmatmul.bf16.gmra.mxu0 %v212
  %v2033 = vpop.f32.mrf.mxu0
  %v2034 = vadd.f32 0.0, %v2033
  %v2035 = vpop.f32.mrf.mxu0
  %v2036 = vadd.f32 0.0, %v2035
  %2037 = vdwg.mxu0
  %2038 = vmatpush.bf16.msra.mxu0 %v1948
  %2039 = vmatpush.bf16.msra.mxu0 %v1947
  %2040 = vmatpush.bf16.msra.mxu0 %v1946
  %2041 = vmatpush.bf16.msra.mxu0 %v1945
  %2042 = vmatpush.bf16.msra.mxu0 %v1944
  %2043 = vmatpush.bf16.msra.mxu0 %v1943
  %2044 = vmatpush.bf16.msra.mxu0 %v1942
  %2045 = vmatpush.bf16.msra.mxu0 %v1941
  %2046 = vmatmul.bf16.gmra.mxu0 %v183
  %v2047 = vpop.f32.mrf.mxu0
  %v2048 = vadd.f32 %v1959, %v2047
  %v2049 = vpop.f32.mrf.mxu0
  %v2050 = vadd.f32 %v1961, %v2049
  %2051 = vmatmul.bf16.gmra.mxu0 %v185
  %v2052 = vpop.f32.mrf.mxu0
  %v2053 = vadd.f32 %v1964, %v2052
  %v2054 = vpop.f32.mrf.mxu0
  %v2055 = vadd.f32 %v1966, %v2054
  %2056 = vmatmul.bf16.gmra.mxu0 %v187
  %v2057 = vpop.f32.mrf.mxu0
  %v2058 = vadd.f32 %v1969, %v2057
  %v2059 = vpop.f32.mrf.mxu0
  %v2060 = vadd.f32 %v1971, %v2059
  %2061 = vmatmul.bf16.gmra.mxu0 %v189
  %v2062 = vpop.f32.mrf.mxu0
  %v2063 = vadd.f32 %v1974, %v2062
  %v2064 = vpop.f32.mrf.mxu0
  %v2065 = vadd.f32 %v1976, %v2064
  %2066 = vmatmul.bf16.gmra.mxu0 %v191
  %v2067 = vpop.f32.mrf.mxu0
  %v2068 = vadd.f32 %v1979, %v2067
  %v2069 = vpop.f32.mrf.mxu0
  %v2070 = vadd.f32 %v1981, %v2069
  %2071 = vmatmul.bf16.gmra.mxu0 %v193
  %v2072 = vpop.f32.mrf.mxu0
  %v2073 = vadd.f32 %v1984, %v2072
  %v2074 = vpop.f32.mrf.mxu0
  %v2075 = vadd.f32 %v1986, %v2074
  %2076 = vmatmul.bf16.gmra.mxu0 %v195
  %v2077 = vpop.f32.mrf.mxu0
  %v2078 = vadd.f32 %v1989, %v2077
  %v2079 = vpop.f32.mrf.mxu0
  %v2080 = vadd.f32 %v1991, %v2079
  %2081 = vmatmul.bf16.gmra.mxu0 %v197
  %v2082 = vpop.f32.mrf.mxu0
  %v2083 = vadd.f32 %v1994, %v2082
  %v2084 = vpop.f32.mrf.mxu0
  %v2085 = vadd.f32 %v1996, %v2084
  %2086 = vmatmul.bf16.gmra.mxu0 %v199
  %v2087 = vpop.f32.mrf.mxu0
  %v2088 = vadd.f32 %v1999, %v2087
  %v2089 = vpop.f32.mrf.mxu0
  %v2090 = vadd.f32 %v2001, %v2089
  %2091 = vmatmul.bf16.gmra.mxu0 %v201
  %v2092 = vpop.f32.mrf.mxu0
  %v2093 = vadd.f32 %v2004, %v2092
  %v2094 = vpop.f32.mrf.mxu0
  %v2095 = vadd.f32 %v2006, %v2094
  %2096 = vmatmul.bf16.gmra.mxu0 %v203
  %v2097 = vpop.f32.mrf.mxu0
  %v2098 = vadd.f32 %v2009, %v2097
  %v2099 = vpop.f32.mrf.mxu0
  %v2100 = vadd.f32 %v2011, %v2099
  %2101 = vmatmul.bf16.gmra.mxu0 %v205
  %v2102 = vpop.f32.mrf.mxu0
  %v2103 = vadd.f32 %v2014, %v2102
  %v2104 = vpop.f32.mrf.mxu0
  %v2105 = vadd.f32 %v2016, %v2104
  %2106 = vmatmul.bf16.gmra.mxu0 %v207
  %v2107 = vpop.f32.mrf.mxu0
  %v2108 = vadd.f32 %v2019, %v2107
  %v2109 = vpop.f32.mrf.mxu0
  %v2110 = vadd.f32 %v2021, %v2109
  %2111 = vmatmul.bf16.gmra.mxu0 %v209
  %v2112 = vpop.f32.mrf.mxu0
  %v2113 = vadd.f32 %v2024, %v2112
  %v2114 = vpop.f32.mrf.mxu0
  %v2115 = vadd.f32 %v2026, %v2114
  %2116 = vmatmul.bf16.gmra.mxu0 %v211
  %v2117 = vpop.f32.mrf.mxu0
  %v2118 = vadd.f32 %v2029, %v2117
  %v2119 = vpop.f32.mrf.mxu0
  %v2120 = vadd.f32 %v2031, %v2119
  %2121 = vmatmul.bf16.gmra.mxu0 %v213
  %v2122 = vpop.f32.mrf.mxu0
  %v2123 = vadd.f32 %v2034, %v2122
  %v2124 = vpop.f32.mrf.mxu0
  %v2125 = vadd.f32 %v2036, %v2124
  %2126 = vdwg.mxu0
  %v2127 = vmul.f32 %v2048, %v731
  %v2128 = vmul.f32 %v2050, %v736
  %v2129 = vmul.f32 %v2053, %v741
  %v2130 = vmul.f32 %v2055, %v746
  %v2131 = vmul.f32 %v2058, %v751
  %v2132 = vmul.f32 %v2060, %v756
  %v2133 = vmul.f32 %v2063, %v761
  %v2134 = vmul.f32 %v2065, %v766
  %v2135 = vmul.f32 %v2068, %v771
  %v2136 = vmul.f32 %v2070, %v776
  %v2137 = vmul.f32 %v2073, %v781
  %v2138 = vmul.f32 %v2075, %v786
  %v2139 = vmul.f32 %v2078, %v791
  %v2140 = vmul.f32 %v2080, %v796
  %v2141 = vmul.f32 %v2083, %v801
  %v2142 = vmul.f32 %v2085, %v806
  %v2143 = vmul.f32 %v2088, %v811
  %v2144 = vmul.f32 %v2090, %v816
  %v2145 = vmul.f32 %v2093, %v821
  %v2146 = vmul.f32 %v2095, %v826
  %v2147 = vmul.f32 %v2098, %v831
  %v2148 = vmul.f32 %v2100, %v836
  %v2149 = vmul.f32 %v2103, %v841
  %v2150 = vmul.f32 %v2105, %v846
  %v2151 = vmul.f32 %v2108, %v851
  %v2152 = vmul.f32 %v2110, %v856
  %v2153 = vmul.f32 %v2113, %v861
  %v2154 = vmul.f32 %v2115, %v866
  %v2155 = vmul.f32 %v2118, %v871
  %v2156 = vmul.f32 %v2120, %v876
  %v2157 = vmul.f32 %v2123, %v881
  %v2158 = vmul.f32 %v2125, %v886
  %v2159 = vld [vmem:[%s9] sm:$0xff]
  %v2160 = vld [vmem:[%s9 + $0x8] sm:$0xff]
  %v2161 = vld [vmem:[%s9 + $0x10] sm:$0xff]
  %v2162 = vld [vmem:[%s9 + $0x18] sm:$0xff]
  %v2163 = vld [vmem:[%s10] sm:$0x1]
  %v2165 = vperm.slane %v2163, 0
  %v2168 = vsel %vm1588, %v2127, 0
  %v2171 = vsel %vm1588, %v2128, 0
  %v2174 = vsel %vm1588, %v2129, 0
  %v2177 = vsel %vm1588, %v2130, 0
  %v2180 = vsel %vm1588, %v2131, 0
  %v2183 = vsel %vm1588, %v2132, 0
  %v2186 = vsel %vm1588, %v2133, 0
  %v2189 = vsel %vm1588, %v2134, 0
  %v2192 = vsel %vm1588, %v2135, 0
  %v2195 = vsel %vm1588, %v2136, 0
  %v2198 = vsel %vm1588, %v2137, 0
  %v2201 = vsel %vm1588, %v2138, 0
  %v2204 = vsel %vm1588, %v2139, 0
  %v2207 = vsel %vm1588, %v2140, 0
  %v2210 = vsel %vm1588, %v2141, 0
  %v2213 = vsel %vm1588, %v2142, 0
  %v2216 = vsel %vm1588, %v2143, 0
  %v2219 = vsel %vm1588, %v2144, 0
  %v2222 = vsel %vm1588, %v2145, 0
  %v2225 = vsel %vm1588, %v2146, 0
  %v2228 = vsel %vm1588, %v2147, 0
  %v2231 = vsel %vm1588, %v2148, 0
  %v2234 = vsel %vm1588, %v2149, 0
  %v2237 = vsel %vm1588, %v2150, 0
  %v2240 = vsel %vm1588, %v2151, 0
  %v2243 = vsel %vm1588, %v2152, 0
  %v2246 = vsel %vm1588, %v2153, 0
  %v2249 = vsel %vm1588, %v2154, 0
  %v2252 = vsel %vm1588, %v2155, 0
  %v2255 = vsel %vm1588, %v2156, 0
  %v2258 = vsel %vm1588, %v2157, 0
  %v2261 = vsel %vm1588, %v2158, 0
  %2263 = vmatpush.msra.mxu0 0.0
  %2264 = vmatpush.msra.mxu0 0.0
  %2265 = vmatpush.msra.mxu0 0.0
  %2266 = vmatpush.msra.mxu0 0.0
  %2267 = vmatpush.msra.mxu0 0.0
  %2268 = vmatpush.msra.mxu0 0.0
  %2269 = vmatpush.msra.mxu0 0.0
  %2270 = vmatpush.msra.mxu0 0.0
  %2271 = vmatpush.msra.mxu0 0.0
  %2272 = vmatpush.msra.mxu0 0.0
  %2273 = vmatpush.msra.mxu0 0.0
  %2274 = vmatpush.msra.mxu0 0.0
  %2275 = vmatpush.msra.mxu0 %v2162
  %2276 = vmatpush.msra.mxu0 %v2161
  %2277 = vmatpush.msra.mxu0 %v2160
  %2278 = vmatpush.msra.mxu0 %v2159
  %2279 = vmatmul.f32.gmra.mxu0 %v2168
  %v2280 = vpop.f32.mrf.mxu0
  %v2281 = vadd.f32 %v2165, %v2280
  %2282 = vmatmul.f32.gmra.mxu0 %v2171
  %v2283 = vpop.f32.mrf.mxu0
  %v2284 = vadd.f32 %v2165, %v2283
  %2285 = vmatmul.f32.gmra.mxu0 %v2174
  %v2286 = vpop.f32.mrf.mxu0
  %v2287 = vadd.f32 %v2165, %v2286
  %2288 = vmatmul.f32.gmra.mxu0 %v2177
  %v2289 = vpop.f32.mrf.mxu0
  %v2290 = vadd.f32 %v2165, %v2289
  %2291 = vmatmul.f32.gmra.mxu0 %v2180
  %v2292 = vpop.f32.mrf.mxu0
  %v2293 = vadd.f32 %v2165, %v2292
  %2294 = vmatmul.f32.gmra.mxu0 %v2183
  %v2295 = vpop.f32.mrf.mxu0
  %v2296 = vadd.f32 %v2165, %v2295
  %2297 = vmatmul.f32.gmra.mxu0 %v2186
  %v2298 = vpop.f32.mrf.mxu0
  %v2299 = vadd.f32 %v2165, %v2298
  %2300 = vmatmul.f32.gmra.mxu0 %v2189
  %v2301 = vpop.f32.mrf.mxu0
  %v2302 = vadd.f32 %v2165, %v2301
  %2303 = vmatmul.f32.gmra.mxu0 %v2192
  %v2304 = vpop.f32.mrf.mxu0
  %v2305 = vadd.f32 %v2165, %v2304
  %2306 = vmatmul.f32.gmra.mxu0 %v2195
  %v2307 = vpop.f32.mrf.mxu0
  %v2308 = vadd.f32 %v2165, %v2307
  %2309 = vmatmul.f32.gmra.mxu0 %v2198
  %v2310 = vpop.f32.mrf.mxu0
  %v2311 = vadd.f32 %v2165, %v2310
  %2312 = vmatmul.f32.gmra.mxu0 %v2201
  %v2313 = vpop.f32.mrf.mxu0
  %v2314 = vadd.f32 %v2165, %v2313
  %2315 = vmatmul.f32.gmra.mxu0 %v2204
  %v2316 = vpop.f32.mrf.mxu0
  %v2317 = vadd.f32 %v2165, %v2316
  %2318 = vmatmul.f32.gmra.mxu0 %v2207
  %v2319 = vpop.f32.mrf.mxu0
  %v2320 = vadd.f32 %v2165, %v2319
  %2321 = vmatmul.f32.gmra.mxu0 %v2210
  %v2322 = vpop.f32.mrf.mxu0
  %v2323 = vadd.f32 %v2165, %v2322
  %2324 = vmatmul.f32.gmra.mxu0 %v2213
  %v2325 = vpop.f32.mrf.mxu0
  %v2326 = vadd.f32 %v2165, %v2325
  %2327 = vmatmul.f32.gmra.mxu0 %v2216
  %v2328 = vpop.f32.mrf.mxu0
  %v2329 = vadd.f32 %v2165, %v2328
  %2330 = vmatmul.f32.gmra.mxu0 %v2219
  %v2331 = vpop.f32.mrf.mxu0
  %v2332 = vadd.f32 %v2165, %v2331
  %2333 = vmatmul.f32.gmra.mxu0 %v2222
  %v2334 = vpop.f32.mrf.mxu0
  %v2335 = vadd.f32 %v2165, %v2334
  %2336 = vmatmul.f32.gmra.mxu0 %v2225
  %v2337 = vpop.f32.mrf.mxu0
  %v2338 = vadd.f32 %v2165, %v2337
  %2339 = vmatmul.f32.gmra.mxu0 %v2228
  %v2340 = vpop.f32.mrf.mxu0
  %v2341 = vadd.f32 %v2165, %v2340
  %2342 = vmatmul.f32.gmra.mxu0 %v2231
  %v2343 = vpop.f32.mrf.mxu0
  %v2344 = vadd.f32 %v2165, %v2343
  %2345 = vmatmul.f32.gmra.mxu0 %v2234
  %v2346 = vpop.f32.mrf.mxu0
  %v2347 = vadd.f32 %v2165, %v2346
  %2348 = vmatmul.f32.gmra.mxu0 %v2237
  %v2349 = vpop.f32.mrf.mxu0
  %v2350 = vadd.f32 %v2165, %v2349
  %2351 = vmatmul.f32.gmra.mxu0 %v2240
  %v2352 = vpop.f32.mrf.mxu0
  %v2353 = vadd.f32 %v2165, %v2352
  %2354 = vmatmul.f32.gmra.mxu0 %v2243
  %v2355 = vpop.f32.mrf.mxu0
  %v2356 = vadd.f32 %v2165, %v2355
  %2357 = vmatmul.f32.gmra.mxu0 %v2246
  %v2358 = vpop.f32.mrf.mxu0
  %v2359 = vadd.f32 %v2165, %v2358
  %2360 = vmatmul.f32.gmra.mxu0 %v2249
  %v2361 = vpop.f32.mrf.mxu0
  %v2362 = vadd.f32 %v2165, %v2361
  %2363 = vmatmul.f32.gmra.mxu0 %v2252
  %v2364 = vpop.f32.mrf.mxu0
  %v2365 = vadd.f32 %v2165, %v2364
  %2366 = vmatmul.f32.gmra.mxu0 %v2255
  %v2367 = vpop.f32.mrf.mxu0
  %v2368 = vadd.f32 %v2165, %v2367
  %2369 = vmatmul.f32.gmra.mxu0 %v2258
  %v2370 = vpop.f32.mrf.mxu0
  %v2371 = vadd.f32 %v2165, %v2370
  %2372 = vmatmul.f32.gmra.mxu0 %v2261
  %v2373 = vpop.f32.mrf.mxu0
  %v2374 = vadd.f32 %v2165, %v2373
  %2375 = vdwg.mxu0
  %v2376 = vxor.u32 %v2281, 2147483648
  %v2377 = vxor.u32 %v2284, 2147483648
  %v2378 = vxor.u32 %v2287, 2147483648
  %v2379 = vxor.u32 %v2290, 2147483648
  %v2380 = vxor.u32 %v2293, 2147483648
  %v2381 = vxor.u32 %v2296, 2147483648
  %v2382 = vxor.u32 %v2299, 2147483648
  %v2383 = vxor.u32 %v2302, 2147483648
  %v2384 = vxor.u32 %v2305, 2147483648
  %v2385 = vxor.u32 %v2308, 2147483648
  %v2386 = vxor.u32 %v2311, 2147483648
  %v2387 = vxor.u32 %v2314, 2147483648
  %v2388 = vxor.u32 %v2317, 2147483648
  %v2389 = vxor.u32 %v2320, 2147483648
  %v2390 = vxor.u32 %v2323, 2147483648
  %v2391 = vxor.u32 %v2326, 2147483648
  %v2392 = vxor.u32 %v2329, 2147483648
  %v2393 = vxor.u32 %v2332, 2147483648
  %v2394 = vxor.u32 %v2335, 2147483648
  %v2395 = vxor.u32 %v2338, 2147483648
  %v2396 = vxor.u32 %v2341, 2147483648
  %v2397 = vxor.u32 %v2344, 2147483648
  %v2398 = vxor.u32 %v2347, 2147483648
  %v2399 = vxor.u32 %v2350, 2147483648
  %v2400 = vxor.u32 %v2353, 2147483648
  %v2401 = vxor.u32 %v2356, 2147483648
  %v2402 = vxor.u32 %v2359, 2147483648
  %v2403 = vxor.u32 %v2362, 2147483648
  %v2404 = vxor.u32 %v2365, 2147483648
  %v2405 = vxor.u32 %v2368, 2147483648
  %v2406 = vxor.u32 %v2371, 2147483648
  %v2407 = vxor.u32 %v2374, 2147483648
  %v2408 = vmul.f32 %v2376, 1.442695
  %v2409 = vpow.pop %v2408
  %v2410 = vmul.f32 %v2377, 1.442695
  %v2411 = vpow.pop %v2410
  %v2412 = vmul.f32 %v2378, 1.442695
  %v2413 = vpow.pop %v2412
  %v2414 = vmul.f32 %v2379, 1.442695
  %v2415 = vpow.pop %v2414
  %v2416 = vmul.f32 %v2380, 1.442695
  %v2417 = vpow.pop %v2416
  %v2418 = vmul.f32 %v2381, 1.442695
  %v2419 = vpow.pop %v2418
  %v2420 = vmul.f32 %v2382, 1.442695
  %v2421 = vpow.pop %v2420
  %v2422 = vmul.f32 %v2383, 1.442695
  %v2423 = vpow.pop %v2422
  %v2424 = vmul.f32 %v2384, 1.442695
  %v2425 = vpow.pop %v2424
  %v2426 = vmul.f32 %v2385, 1.442695
  %v2427 = vpow.pop %v2426
  %v2428 = vmul.f32 %v2386, 1.442695
  %v2429 = vpow.pop %v2428
  %v2430 = vmul.f32 %v2387, 1.442695
  %v2431 = vpow.pop %v2430
  %v2432 = vmul.f32 %v2388, 1.442695
  %v2433 = vpow.pop %v2432
  %v2434 = vmul.f32 %v2389, 1.442695
  %v2435 = vpow.pop %v2434
  %v2436 = vmul.f32 %v2390, 1.442695
  %v2437 = vpow.pop %v2436
  %v2438 = vmul.f32 %v2391, 1.442695
  %v2439 = vpow.pop %v2438
  %v2440 = vmul.f32 %v2392, 1.442695
  %v2441 = vpow.pop %v2440
  %v2442 = vmul.f32 %v2393, 1.442695
  %v2443 = vpow.pop %v2442
  %v2444 = vmul.f32 %v2394, 1.442695
  %v2445 = vpow.pop %v2444
  %v2446 = vmul.f32 %v2395, 1.442695
  %v2447 = vpow.pop %v2446
  %v2448 = vmul.f32 %v2396, 1.442695
  %v2449 = vpow.pop %v2448
  %v2450 = vmul.f32 %v2397, 1.442695
  %v2451 = vpow.pop %v2450
  %v2452 = vmul.f32 %v2398, 1.442695
  %v2453 = vpow.pop %v2452
  %v2454 = vmul.f32 %v2399, 1.442695
  %v2455 = vpow.pop %v2454
  %v2456 = vmul.f32 %v2400, 1.442695
  %v2457 = vpow.pop %v2456
  %v2458 = vmul.f32 %v2401, 1.442695
  %v2459 = vpow.pop %v2458
  %v2460 = vmul.f32 %v2402, 1.442695
  %v2461 = vpow.pop %v2460
  %v2462 = vmul.f32 %v2403, 1.442695
  %v2463 = vpow.pop %v2462
  %v2464 = vmul.f32 %v2404, 1.442695
  %v2465 = vpow.pop %v2464
  %v2466 = vmul.f32 %v2405, 1.442695
  %v2467 = vpow.pop %v2466
  %v2468 = vmul.f32 %v2406, 1.442695
  %v2469 = vpow.pop %v2468
  %v2470 = vmul.f32 %v2407, 1.442695
  %v2471 = vpow.pop %v2470
  %v2472 = vadd.f32 %v2409, 1.0
  %v2473 = vadd.f32 %v2411, 1.0
  %v2474 = vadd.f32 %v2413, 1.0
  %v2475 = vadd.f32 %v2415, 1.0
  %v2476 = vadd.f32 %v2417, 1.0
  %v2477 = vadd.f32 %v2419, 1.0
  %v2478 = vadd.f32 %v2421, 1.0
  %v2479 = vadd.f32 %v2423, 1.0
  %v2480 = vadd.f32 %v2425, 1.0
  %v2481 = vadd.f32 %v2427, 1.0
  %v2482 = vadd.f32 %v2429, 1.0
  %v2483 = vadd.f32 %v2431, 1.0
  %v2484 = vadd.f32 %v2433, 1.0
  %v2485 = vadd.f32 %v2435, 1.0
  %v2486 = vadd.f32 %v2437, 1.0
  %v2487 = vadd.f32 %v2439, 1.0
  %v2488 = vadd.f32 %v2441, 1.0
  %v2489 = vadd.f32 %v2443, 1.0
  %v2490 = vadd.f32 %v2445, 1.0
  %v2491 = vadd.f32 %v2447, 1.0
  %v2492 = vadd.f32 %v2449, 1.0
  %v2493 = vadd.f32 %v2451, 1.0
  %v2494 = vadd.f32 %v2453, 1.0
  %v2495 = vadd.f32 %v2455, 1.0
  %v2496 = vadd.f32 %v2457, 1.0
  %v2497 = vadd.f32 %v2459, 1.0
  %v2498 = vadd.f32 %v2461, 1.0
  %v2499 = vadd.f32 %v2463, 1.0
  %v2500 = vadd.f32 %v2465, 1.0
  %v2501 = vadd.f32 %v2467, 1.0
  %v2502 = vadd.f32 %v2469, 1.0
  %v2503 = vadd.f32 %v2471, 1.0
  %v2504 = vrcp.pop %v2472
  %v2505 = vmul.f32 %v2472, %v2504
  %v2506 = vsub.f32 1.0, %v2505
  %v2507 = vmul.f32 %v2504, %v2506
  %v2508 = vadd.f32 %v2504, %v2507
  %vm2509 = vweird.f32 %v2472
  %vm2510 = vweird.f32 %v2504
  %vm2511 = vmor %vm2509, %vm2510
  %v2512 = vsel %vm2511, %v2504, %v2508
  %v2513 = vand.u32 2147483647, %v2472
  %vm2514 = vcmp.eq.f32.partialorder %v2513, 8.507059e+37
  %v2515 = vand.u32 %v2472, 2147483648
  %v2516 = vor.u32 1.1754944e-38, %v2515
  %v2517 = vsel %vm2514, %v2516, %v2512
  %v2518 = vmul.f32 1.0, %v2517
  %v2519 = vrcp.pop %v2473
  %v2520 = vmul.f32 %v2473, %v2519
  %v2521 = vsub.f32 1.0, %v2520
  %v2522 = vmul.f32 %v2519, %v2521
  %v2523 = vadd.f32 %v2519, %v2522
  %vm2524 = vweird.f32 %v2473
  %vm2525 = vweird.f32 %v2519
  %vm2526 = vmor %vm2524, %vm2525
  %v2527 = vsel %vm2526, %v2519, %v2523
  %v2528 = vand.u32 2147483647, %v2473
  %vm2529 = vcmp.eq.f32.partialorder %v2528, 8.507059e+37
  %v2530 = vand.u32 %v2473, 2147483648
  %v2531 = vor.u32 1.1754944e-38, %v2530
  %v2532 = vsel %vm2529, %v2531, %v2527
  %v2533 = vmul.f32 1.0, %v2532
  %v2534 = vrcp.pop %v2474
  %v2535 = vmul.f32 %v2474, %v2534
  %v2536 = vsub.f32 1.0, %v2535
  %v2537 = vmul.f32 %v2534, %v2536
  %v2538 = vadd.f32 %v2534, %v2537
  %vm2539 = vweird.f32 %v2474
  %vm2540 = vweird.f32 %v2534
  %vm2541 = vmor %vm2539, %vm2540
  %v2542 = vsel %vm2541, %v2534, %v2538
  %v2543 = vand.u32 2147483647, %v2474
  %vm2544 = vcmp.eq.f32.partialorder %v2543, 8.507059e+37
  %v2545 = vand.u32 %v2474, 2147483648
  %v2546 = vor.u32 1.1754944e-38, %v2545
  %v2547 = vsel %vm2544, %v2546, %v2542
  %v2548 = vmul.f32 1.0, %v2547
  %v2549 = vrcp.pop %v2475
  %v2550 = vmul.f32 %v2475, %v2549
  %v2551 = vsub.f32 1.0, %v2550
  %v2552 = vmul.f32 %v2549, %v2551
  %v2553 = vadd.f32 %v2549, %v2552
  %vm2554 = vweird.f32 %v2475
  %vm2555 = vweird.f32 %v2549
  %vm2556 = vmor %vm2554, %vm2555
  %v2557 = vsel %vm2556, %v2549, %v2553
  %v2558 = vand.u32 2147483647, %v2475
  %vm2559 = vcmp.eq.f32.partialorder %v2558, 8.507059e+37
  %v2560 = vand.u32 %v2475, 2147483648
  %v2561 = vor.u32 1.1754944e-38, %v2560
  %v2562 = vsel %vm2559, %v2561, %v2557
  %v2563 = vmul.f32 1.0, %v2562
  %v2564 = vrcp.pop %v2476
  %v2565 = vmul.f32 %v2476, %v2564
  %v2566 = vsub.f32 1.0, %v2565
  %v2567 = vmul.f32 %v2564, %v2566
  %v2568 = vadd.f32 %v2564, %v2567
  %vm2569 = vweird.f32 %v2476
  %vm2570 = vweird.f32 %v2564
  %vm2571 = vmor %vm2569, %vm2570
  %v2572 = vsel %vm2571, %v2564, %v2568
  %v2573 = vand.u32 2147483647, %v2476
  %vm2574 = vcmp.eq.f32.partialorder %v2573, 8.507059e+37
  %v2575 = vand.u32 %v2476, 2147483648
  %v2576 = vor.u32 1.1754944e-38, %v2575
  %v2577 = vsel %vm2574, %v2576, %v2572
  %v2578 = vmul.f32 1.0, %v2577
  %v2579 = vrcp.pop %v2477
  %v2580 = vmul.f32 %v2477, %v2579
  %v2581 = vsub.f32 1.0, %v2580
  %v2582 = vmul.f32 %v2579, %v2581
  %v2583 = vadd.f32 %v2579, %v2582
  %vm2584 = vweird.f32 %v2477
  %vm2585 = vweird.f32 %v2579
  %vm2586 = vmor %vm2584, %vm2585
  %v2587 = vsel %vm2586, %v2579, %v2583
  %v2588 = vand.u32 2147483647, %v2477
  %vm2589 = vcmp.eq.f32.partialorder %v2588, 8.507059e+37
  %v2590 = vand.u32 %v2477, 2147483648
  %v2591 = vor.u32 1.1754944e-38, %v2590
  %v2592 = vsel %vm2589, %v2591, %v2587
  %v2593 = vmul.f32 1.0, %v2592
  %v2594 = vrcp.pop %v2478
  %v2595 = vmul.f32 %v2478, %v2594
  %v2596 = vsub.f32 1.0, %v2595
  %v2597 = vmul.f32 %v2594, %v2596
  %v2598 = vadd.f32 %v2594, %v2597
  %vm2599 = vweird.f32 %v2478
  %vm2600 = vweird.f32 %v2594
  %vm2601 = vmor %vm2599, %vm2600
  %v2602 = vsel %vm2601, %v2594, %v2598
  %v2603 = vand.u32 2147483647, %v2478
  %vm2604 = vcmp.eq.f32.partialorder %v2603, 8.507059e+37
  %v2605 = vand.u32 %v2478, 2147483648
  %v2606 = vor.u32 1.1754944e-38, %v2605
  %v2607 = vsel %vm2604, %v2606, %v2602
  %v2608 = vmul.f32 1.0, %v2607
  %v2609 = vrcp.pop %v2479
  %v2610 = vmul.f32 %v2479, %v2609
  %v2611 = vsub.f32 1.0, %v2610
  %v2612 = vmul.f32 %v2609, %v2611
  %v2613 = vadd.f32 %v2609, %v2612
  %vm2614 = vweird.f32 %v2479
  %vm2615 = vweird.f32 %v2609
  %vm2616 = vmor %vm2614, %vm2615
  %v2617 = vsel %vm2616, %v2609, %v2613
  %v2618 = vand.u32 2147483647, %v2479
  %vm2619 = vcmp.eq.f32.partialorder %v2618, 8.507059e+37
  %v2620 = vand.u32 %v2479, 2147483648
  %v2621 = vor.u32 1.1754944e-38, %v2620
  %v2622 = vsel %vm2619, %v2621, %v2617
  %v2623 = vmul.f32 1.0, %v2622
  %v2624 = vrcp.pop %v2480
  %v2625 = vmul.f32 %v2480, %v2624
  %v2626 = vsub.f32 1.0, %v2625
  %v2627 = vmul.f32 %v2624, %v2626
  %v2628 = vadd.f32 %v2624, %v2627
  %vm2629 = vweird.f32 %v2480
  %vm2630 = vweird.f32 %v2624
  %vm2631 = vmor %vm2629, %vm2630
  %v2632 = vsel %vm2631, %v2624, %v2628
  %v2633 = vand.u32 2147483647, %v2480
  %vm2634 = vcmp.eq.f32.partialorder %v2633, 8.507059e+37
  %v2635 = vand.u32 %v2480, 2147483648
  %v2636 = vor.u32 1.1754944e-38, %v2635
  %v2637 = vsel %vm2634, %v2636, %v2632
  %v2638 = vmul.f32 1.0, %v2637
  %v2639 = vrcp.pop %v2481
  %v2640 = vmul.f32 %v2481, %v2639
  %v2641 = vsub.f32 1.0, %v2640
  %v2642 = vmul.f32 %v2639, %v2641
  %v2643 = vadd.f32 %v2639, %v2642
  %vm2644 = vweird.f32 %v2481
  %vm2645 = vweird.f32 %v2639
  %vm2646 = vmor %vm2644, %vm2645
  %v2647 = vsel %vm2646, %v2639, %v2643
  %v2648 = vand.u32 2147483647, %v2481
  %vm2649 = vcmp.eq.f32.partialorder %v2648, 8.507059e+37
  %v2650 = vand.u32 %v2481, 2147483648
  %v2651 = vor.u32 1.1754944e-38, %v2650
  %v2652 = vsel %vm2649, %v2651, %v2647
  %v2653 = vmul.f32 1.0, %v2652
  %v2654 = vrcp.pop %v2482
  %v2655 = vmul.f32 %v2482, %v2654
  %v2656 = vsub.f32 1.0, %v2655
  %v2657 = vmul.f32 %v2654, %v2656
  %v2658 = vadd.f32 %v2654, %v2657
  %vm2659 = vweird.f32 %v2482
  %vm2660 = vweird.f32 %v2654
  %vm2661 = vmor %vm2659, %vm2660
  %v2662 = vsel %vm2661, %v2654, %v2658
  %v2663 = vand.u32 2147483647, %v2482
  %vm2664 = vcmp.eq.f32.partialorder %v2663, 8.507059e+37
  %v2665 = vand.u32 %v2482, 2147483648
  %v2666 = vor.u32 1.1754944e-38, %v2665
  %v2667 = vsel %vm2664, %v2666, %v2662
  %v2668 = vmul.f32 1.0, %v2667
  %v2669 = vrcp.pop %v2483
  %v2670 = vmul.f32 %v2483, %v2669
  %v2671 = vsub.f32 1.0, %v2670
  %v2672 = vmul.f32 %v2669, %v2671
  %v2673 = vadd.f32 %v2669, %v2672
  %vm2674 = vweird.f32 %v2483
  %vm2675 = vweird.f32 %v2669
  %vm2676 = vmor %vm2674, %vm2675
  %v2677 = vsel %vm2676, %v2669, %v2673
  %v2678 = vand.u32 2147483647, %v2483
  %vm2679 = vcmp.eq.f32.partialorder %v2678, 8.507059e+37
  %v2680 = vand.u32 %v2483, 2147483648
  %v2681 = vor.u32 1.1754944e-38, %v2680
  %v2682 = vsel %vm2679, %v2681, %v2677
  %v2683 = vmul.f32 1.0, %v2682
  %v2684 = vrcp.pop %v2484
  %v2685 = vmul.f32 %v2484, %v2684
  %v2686 = vsub.f32 1.0, %v2685
  %v2687 = vmul.f32 %v2684, %v2686
  %v2688 = vadd.f32 %v2684, %v2687
  %vm2689 = vweird.f32 %v2484
  %vm2690 = vweird.f32 %v2684
  %vm2691 = vmor %vm2689, %vm2690
  %v2692 = vsel %vm2691, %v2684, %v2688
  %v2693 = vand.u32 2147483647, %v2484
  %vm2694 = vcmp.eq.f32.partialorder %v2693, 8.507059e+37
  %v2695 = vand.u32 %v2484, 2147483648
  %v2696 = vor.u32 1.1754944e-38, %v2695
  %v2697 = vsel %vm2694, %v2696, %v2692
  %v2698 = vmul.f32 1.0, %v2697
  %v2699 = vrcp.pop %v2485
  %v2700 = vmul.f32 %v2485, %v2699
  %v2701 = vsub.f32 1.0, %v2700
  %v2702 = vmul.f32 %v2699, %v2701
  %v2703 = vadd.f32 %v2699, %v2702
  %vm2704 = vweird.f32 %v2485
  %vm2705 = vweird.f32 %v2699
  %vm2706 = vmor %vm2704, %vm2705
  %v2707 = vsel %vm2706, %v2699, %v2703
  %v2708 = vand.u32 2147483647, %v2485
  %vm2709 = vcmp.eq.f32.partialorder %v2708, 8.507059e+37
  %v2710 = vand.u32 %v2485, 2147483648
  %v2711 = vor.u32 1.1754944e-38, %v2710
  %v2712 = vsel %vm2709, %v2711, %v2707
  %v2713 = vmul.f32 1.0, %v2712
  %v2714 = vrcp.pop %v2486
  %v2715 = vmul.f32 %v2486, %v2714
  %v2716 = vsub.f32 1.0, %v2715
  %v2717 = vmul.f32 %v2714, %v2716
  %v2718 = vadd.f32 %v2714, %v2717
  %vm2719 = vweird.f32 %v2486
  %vm2720 = vweird.f32 %v2714
  %vm2721 = vmor %vm2719, %vm2720
  %v2722 = vsel %vm2721, %v2714, %v2718
  %v2723 = vand.u32 2147483647, %v2486
  %vm2724 = vcmp.eq.f32.partialorder %v2723, 8.507059e+37
  %v2725 = vand.u32 %v2486, 2147483648
  %v2726 = vor.u32 1.1754944e-38, %v2725
  %v2727 = vsel %vm2724, %v2726, %v2722
  %v2728 = vmul.f32 1.0, %v2727
  %v2729 = vrcp.pop %v2487
  %v2730 = vmul.f32 %v2487, %v2729
  %v2731 = vsub.f32 1.0, %v2730
  %v2732 = vmul.f32 %v2729, %v2731
  %v2733 = vadd.f32 %v2729, %v2732
  %vm2734 = vweird.f32 %v2487
  %vm2735 = vweird.f32 %v2729
  %vm2736 = vmor %vm2734, %vm2735
  %v2737 = vsel %vm2736, %v2729, %v2733
  %v2738 = vand.u32 2147483647, %v2487
  %vm2739 = vcmp.eq.f32.partialorder %v2738, 8.507059e+37
  %v2740 = vand.u32 %v2487, 2147483648
  %v2741 = vor.u32 1.1754944e-38, %v2740
  %v2742 = vsel %vm2739, %v2741, %v2737
  %v2743 = vmul.f32 1.0, %v2742
  %v2744 = vrcp.pop %v2488
  %v2745 = vmul.f32 %v2488, %v2744
  %v2746 = vsub.f32 1.0, %v2745
  %v2747 = vmul.f32 %v2744, %v2746
  %v2748 = vadd.f32 %v2744, %v2747
  %vm2749 = vweird.f32 %v2488
  %vm2750 = vweird.f32 %v2744
  %vm2751 = vmor %vm2749, %vm2750
  %v2752 = vsel %vm2751, %v2744, %v2748
  %v2753 = vand.u32 2147483647, %v2488
  %vm2754 = vcmp.eq.f32.partialorder %v2753, 8.507059e+37
  %v2755 = vand.u32 %v2488, 2147483648
  %v2756 = vor.u32 1.1754944e-38, %v2755
  %v2757 = vsel %vm2754, %v2756, %v2752
  %v2758 = vmul.f32 1.0, %v2757
  %v2759 = vrcp.pop %v2489
  %v2760 = vmul.f32 %v2489, %v2759
  %v2761 = vsub.f32 1.0, %v2760
  %v2762 = vmul.f32 %v2759, %v2761
  %v2763 = vadd.f32 %v2759, %v2762
  %vm2764 = vweird.f32 %v2489
  %vm2765 = vweird.f32 %v2759
  %vm2766 = vmor %vm2764, %vm2765
  %v2767 = vsel %vm2766, %v2759, %v2763
  %v2768 = vand.u32 2147483647, %v2489
  %vm2769 = vcmp.eq.f32.partialorder %v2768, 8.507059e+37
  %v2770 = vand.u32 %v2489, 2147483648
  %v2771 = vor.u32 1.1754944e-38, %v2770
  %v2772 = vsel %vm2769, %v2771, %v2767
  %v2773 = vmul.f32 1.0, %v2772
  %v2774 = vrcp.pop %v2490
  %v2775 = vmul.f32 %v2490, %v2774
  %v2776 = vsub.f32 1.0, %v2775
  %v2777 = vmul.f32 %v2774, %v2776
  %v2778 = vadd.f32 %v2774, %v2777
  %vm2779 = vweird.f32 %v2490
  %vm2780 = vweird.f32 %v2774
  %vm2781 = vmor %vm2779, %vm2780
  %v2782 = vsel %vm2781, %v2774, %v2778
  %v2783 = vand.u32 2147483647, %v2490
  %vm2784 = vcmp.eq.f32.partialorder %v2783, 8.507059e+37
  %v2785 = vand.u32 %v2490, 2147483648
  %v2786 = vor.u32 1.1754944e-38, %v2785
  %v2787 = vsel %vm2784, %v2786, %v2782
  %v2788 = vmul.f32 1.0, %v2787
  %v2789 = vrcp.pop %v2491
  %v2790 = vmul.f32 %v2491, %v2789
  %v2791 = vsub.f32 1.0, %v2790
  %v2792 = vmul.f32 %v2789, %v2791
  %v2793 = vadd.f32 %v2789, %v2792
  %vm2794 = vweird.f32 %v2491
  %vm2795 = vweird.f32 %v2789
  %vm2796 = vmor %vm2794, %vm2795
  %v2797 = vsel %vm2796, %v2789, %v2793
  %v2798 = vand.u32 2147483647, %v2491
  %vm2799 = vcmp.eq.f32.partialorder %v2798, 8.507059e+37
  %v2800 = vand.u32 %v2491, 2147483648
  %v2801 = vor.u32 1.1754944e-38, %v2800
  %v2802 = vsel %vm2799, %v2801, %v2797
  %v2803 = vmul.f32 1.0, %v2802
  %v2804 = vrcp.pop %v2492
  %v2805 = vmul.f32 %v2492, %v2804
  %v2806 = vsub.f32 1.0, %v2805
  %v2807 = vmul.f32 %v2804, %v2806
  %v2808 = vadd.f32 %v2804, %v2807
  %vm2809 = vweird.f32 %v2492
  %vm2810 = vweird.f32 %v2804
  %vm2811 = vmor %vm2809, %vm2810
  %v2812 = vsel %vm2811, %v2804, %v2808
  %v2813 = vand.u32 2147483647, %v2492
  %vm2814 = vcmp.eq.f32.partialorder %v2813, 8.507059e+37
  %v2815 = vand.u32 %v2492, 2147483648
  %v2816 = vor.u32 1.1754944e-38, %v2815
  %v2817 = vsel %vm2814, %v2816, %v2812
  %v2818 = vmul.f32 1.0, %v2817
  %v2819 = vrcp.pop %v2493
  %v2820 = vmul.f32 %v2493, %v2819
  %v2821 = vsub.f32 1.0, %v2820
  %v2822 = vmul.f32 %v2819, %v2821
  %v2823 = vadd.f32 %v2819, %v2822
  %vm2824 = vweird.f32 %v2493
  %vm2825 = vweird.f32 %v2819
  %vm2826 = vmor %vm2824, %vm2825
  %v2827 = vsel %vm2826, %v2819, %v2823
  %v2828 = vand.u32 2147483647, %v2493
  %vm2829 = vcmp.eq.f32.partialorder %v2828, 8.507059e+37
  %v2830 = vand.u32 %v2493, 2147483648
  %v2831 = vor.u32 1.1754944e-38, %v2830
  %v2832 = vsel %vm2829, %v2831, %v2827
  %v2833 = vmul.f32 1.0, %v2832
  %v2834 = vrcp.pop %v2494
  %v2835 = vmul.f32 %v2494, %v2834
  %v2836 = vsub.f32 1.0, %v2835
  %v2837 = vmul.f32 %v2834, %v2836
  %v2838 = vadd.f32 %v2834, %v2837
  %vm2839 = vweird.f32 %v2494
  %vm2840 = vweird.f32 %v2834
  %vm2841 = vmor %vm2839, %vm2840
  %v2842 = vsel %vm2841, %v2834, %v2838
  %v2843 = vand.u32 2147483647, %v2494
  %vm2844 = vcmp.eq.f32.partialorder %v2843, 8.507059e+37
  %v2845 = vand.u32 %v2494, 2147483648
  %v2846 = vor.u32 1.1754944e-38, %v2845
  %v2847 = vsel %vm2844, %v2846, %v2842
  %v2848 = vmul.f32 1.0, %v2847
  %v2849 = vrcp.pop %v2495
  %v2850 = vmul.f32 %v2495, %v2849
  %v2851 = vsub.f32 1.0, %v2850
  %v2852 = vmul.f32 %v2849, %v2851
  %v2853 = vadd.f32 %v2849, %v2852
  %vm2854 = vweird.f32 %v2495
  %vm2855 = vweird.f32 %v2849
  %vm2856 = vmor %vm2854, %vm2855
  %v2857 = vsel %vm2856, %v2849, %v2853
  %v2858 = vand.u32 2147483647, %v2495
  %vm2859 = vcmp.eq.f32.partialorder %v2858, 8.507059e+37
  %v2860 = vand.u32 %v2495, 2147483648
  %v2861 = vor.u32 1.1754944e-38, %v2860
  %v2862 = vsel %vm2859, %v2861, %v2857
  %v2863 = vmul.f32 1.0, %v2862
  %v2864 = vrcp.pop %v2496
  %v2865 = vmul.f32 %v2496, %v2864
  %v2866 = vsub.f32 1.0, %v2865
  %v2867 = vmul.f32 %v2864, %v2866
  %v2868 = vadd.f32 %v2864, %v2867
  %vm2869 = vweird.f32 %v2496
  %vm2870 = vweird.f32 %v2864
  %vm2871 = vmor %vm2869, %vm2870
  %v2872 = vsel %vm2871, %v2864, %v2868
  %v2873 = vand.u32 2147483647, %v2496
  %vm2874 = vcmp.eq.f32.partialorder %v2873, 8.507059e+37
  %v2875 = vand.u32 %v2496, 2147483648
  %v2876 = vor.u32 1.1754944e-38, %v2875
  %v2877 = vsel %vm2874, %v2876, %v2872
  %v2878 = vmul.f32 1.0, %v2877
  %v2879 = vrcp.pop %v2497
  %v2880 = vmul.f32 %v2497, %v2879
  %v2881 = vsub.f32 1.0, %v2880
  %v2882 = vmul.f32 %v2879, %v2881
  %v2883 = vadd.f32 %v2879, %v2882
  %vm2884 = vweird.f32 %v2497
  %vm2885 = vweird.f32 %v2879
  %vm2886 = vmor %vm2884, %vm2885
  %v2887 = vsel %vm2886, %v2879, %v2883
  %v2888 = vand.u32 2147483647, %v2497
  %vm2889 = vcmp.eq.f32.partialorder %v2888, 8.507059e+37
  %v2890 = vand.u32 %v2497, 2147483648
  %v2891 = vor.u32 1.1754944e-38, %v2890
  %v2892 = vsel %vm2889, %v2891, %v2887
  %v2893 = vmul.f32 1.0, %v2892
  %v2894 = vrcp.pop %v2498
  %v2895 = vmul.f32 %v2498, %v2894
  %v2896 = vsub.f32 1.0, %v2895
  %v2897 = vmul.f32 %v2894, %v2896
  %v2898 = vadd.f32 %v2894, %v2897
  %vm2899 = vweird.f32 %v2498
  %vm2900 = vweird.f32 %v2894
  %vm2901 = vmor %vm2899, %vm2900
  %v2902 = vsel %vm2901, %v2894, %v2898
  %v2903 = vand.u32 2147483647, %v2498
  %vm2904 = vcmp.eq.f32.partialorder %v2903, 8.507059e+37
  %v2905 = vand.u32 %v2498, 2147483648
  %v2906 = vor.u32 1.1754944e-38, %v2905
  %v2907 = vsel %vm2904, %v2906, %v2902
  %v2908 = vmul.f32 1.0, %v2907
  %v2909 = vrcp.pop %v2499
  %v2910 = vmul.f32 %v2499, %v2909
  %v2911 = vsub.f32 1.0, %v2910
  %v2912 = vmul.f32 %v2909, %v2911
  %v2913 = vadd.f32 %v2909, %v2912
  %vm2914 = vweird.f32 %v2499
  %vm2915 = vweird.f32 %v2909
  %vm2916 = vmor %vm2914, %vm2915
  %v2917 = vsel %vm2916, %v2909, %v2913
  %v2918 = vand.u32 2147483647, %v2499
  %vm2919 = vcmp.eq.f32.partialorder %v2918, 8.507059e+37
  %v2920 = vand.u32 %v2499, 2147483648
  %v2921 = vor.u32 1.1754944e-38, %v2920
  %v2922 = vsel %vm2919, %v2921, %v2917
  %v2923 = vmul.f32 1.0, %v2922
  %v2924 = vrcp.pop %v2500
  %v2925 = vmul.f32 %v2500, %v2924
  %v2926 = vsub.f32 1.0, %v2925
  %v2927 = vmul.f32 %v2924, %v2926
  %v2928 = vadd.f32 %v2924, %v2927
  %vm2929 = vweird.f32 %v2500
  %vm2930 = vweird.f32 %v2924
  %vm2931 = vmor %vm2929, %vm2930
  %v2932 = vsel %vm2931, %v2924, %v2928
  %v2933 = vand.u32 2147483647, %v2500
  %vm2934 = vcmp.eq.f32.partialorder %v2933, 8.507059e+37
  %v2935 = vand.u32 %v2500, 2147483648
  %v2936 = vor.u32 1.1754944e-38, %v2935
  %v2937 = vsel %vm2934, %v2936, %v2932
  %v2938 = vmul.f32 1.0, %v2937
  %v2939 = vrcp.pop %v2501
  %v2940 = vmul.f32 %v2501, %v2939
  %v2941 = vsub.f32 1.0, %v2940
  %v2942 = vmul.f32 %v2939, %v2941
  %v2943 = vadd.f32 %v2939, %v2942
  %vm2944 = vweird.f32 %v2501
  %vm2945 = vweird.f32 %v2939
  %vm2946 = vmor %vm2944, %vm2945
  %v2947 = vsel %vm2946, %v2939, %v2943
  %v2948 = vand.u32 2147483647, %v2501
  %vm2949 = vcmp.eq.f32.partialorder %v2948, 8.507059e+37
  %v2950 = vand.u32 %v2501, 2147483648
  %v2951 = vor.u32 1.1754944e-38, %v2950
  %v2952 = vsel %vm2949, %v2951, %v2947
  %v2953 = vmul.f32 1.0, %v2952
  %v2954 = vrcp.pop %v2502
  %v2955 = vmul.f32 %v2502, %v2954
  %v2956 = vsub.f32 1.0, %v2955
  %v2957 = vmul.f32 %v2954, %v2956
  %v2958 = vadd.f32 %v2954, %v2957
  %vm2959 = vweird.f32 %v2502
  %vm2960 = vweird.f32 %v2954
  %vm2961 = vmor %vm2959, %vm2960
  %v2962 = vsel %vm2961, %v2954, %v2958
  %v2963 = vand.u32 2147483647, %v2502
  %vm2964 = vcmp.eq.f32.partialorder %v2963, 8.507059e+37
  %v2965 = vand.u32 %v2502, 2147483648
  %v2966 = vor.u32 1.1754944e-38, %v2965
  %v2967 = vsel %vm2964, %v2966, %v2962
  %v2968 = vmul.f32 1.0, %v2967
  %v2969 = vrcp.pop %v2503
  %v2970 = vmul.f32 %v2503, %v2969
  %v2971 = vsub.f32 1.0, %v2970
  %v2972 = vmul.f32 %v2969, %v2971
  %v2973 = vadd.f32 %v2969, %v2972
  %vm2974 = vweird.f32 %v2503
  %vm2975 = vweird.f32 %v2969
  %vm2976 = vmor %vm2974, %vm2975
  %v2977 = vsel %vm2976, %v2969, %v2973
  %v2978 = vand.u32 2147483647, %v2503
  %vm2979 = vcmp.eq.f32.partialorder %v2978, 8.507059e+37
  %v2980 = vand.u32 %v2503, 2147483648
  %v2981 = vor.u32 1.1754944e-38, %v2980
  %v2982 = vsel %vm2979, %v2981, %v2977
  %v2983 = vmul.f32 1.0, %v2982
  %2984 = vst [vmem:[%s11] sm:$0xff] %v2518
  %2985 = vst [vmem:[%s11 + $0x8] sm:$0xff] %v2533
  %2986 = vst [vmem:[%s11 + $0x10] sm:$0xff] %v2548
  %2987 = vst [vmem:[%s11 + $0x18] sm:$0xff] %v2563
  %2988 = vst [vmem:[%s11 + $0x20] sm:$0xff] %v2578
  %2989 = vst [vmem:[%s11 + $0x28] sm:$0xff] %v2593
  %2990 = vst [vmem:[%s11 + $0x30] sm:$0xff] %v2608
  %2991 = vst [vmem:[%s11 + $0x38] sm:$0xff] %v2623
  %2992 = vst [vmem:[%s11 + $0x40] sm:$0xff] %v2638
  %2993 = vst [vmem:[%s11 + $0x48] sm:$0xff] %v2653
  %2994 = vst [vmem:[%s11 + $0x50] sm:$0xff] %v2668
  %2995 = vst [vmem:[%s11 + $0x58] sm:$0xff] %v2683
  %2996 = vst [vmem:[%s11 + $0x60] sm:$0xff] %v2698
  %2997 = vst [vmem:[%s11 + $0x68] sm:$0xff] %v2713
  %2998 = vst [vmem:[%s11 + $0x70] sm:$0xff] %v2728
  %2999 = vst [vmem:[%s11 + $0x78] sm:$0xff] %v2743
  %3000 = vst [vmem:[%s11 + $0x80] sm:$0xff] %v2758
  %3001 = vst [vmem:[%s11 + $0x88] sm:$0xff] %v2773
  %3002 = vst [vmem:[%s11 + $0x90] sm:$0xff] %v2788
  %3003 = vst [vmem:[%s11 + $0x98] sm:$0xff] %v2803
  %3004 = vst [vmem:[%s11 + $0xa0] sm:$0xff] %v2818
  %3005 = vst [vmem:[%s11 + $0xa8] sm:$0xff] %v2833
  %3006 = vst [vmem:[%s11 + $0xb0] sm:$0xff] %v2848
  %3007 = vst [vmem:[%s11 + $0xb8] sm:$0xff] %v2863
  %3008 = vst [vmem:[%s11 + $0xc0] sm:$0xff] %v2878
  %3009 = vst [vmem:[%s11 + $0xc8] sm:$0xff] %v2893
  %3010 = vst [vmem:[%s11 + $0xd0] sm:$0xff] %v2908
  %3011 = vst [vmem:[%s11 + $0xd8] sm:$0xff] %v2923
  %3012 = vst [vmem:[%s11 + $0xe0] sm:$0xff] %v2938
  %3013 = vst [vmem:[%s11 + $0xe8] sm:$0xff] %v2953
  %3014 = vst [vmem:[%s11 + $0xf0] sm:$0xff] %v2968
  %3015 = vst [vmem:[%s11 + $0xf8] sm:$0xff] %v2983
  // Predicated region
  $region46: #{faultgnn_forward.1} parent=0 // pred_check
    _
  $region47: #{faultgnn_forward.1} parent=0 // pred_check_branch
    %3017 = sbr.rel (0) target = $region49
  $region48: #{faultgnn_forward.1} parent=0 // pred_region
    _
  $region49: #{faultgnn_forward.1} parent=0 // pred_fallthru
    _
  // Predicated region
  $region50: #{faultgnn_forward.1} parent=0 // pred_check
    _
  $region51: #{faultgnn_forward.1} parent=0 // pred_check_branch
    %3019 = sbr.rel (0) target = $region53
  $region52: #{faultgnn_forward.1} parent=0 // pred_region
    _
  $region53: #{faultgnn_forward.1} parent=0 // pred_fallthru
    _

</llo_original>
